<compile_context>
chip_gen: v6e
topology: v6e:2x2x1
jax: 0.10.0
libtpu: 0.0.40
codegen_flags: <defaults>
</compile_context>

<pallas_src>
import functools

import jax
import jax.numpy as jnp
from jax.experimental import pallas as pl
from jax.experimental.pallas import tpu as pltpu


def _round_up(x, m):
    return (x + m - 1) // m * m


def _pad_last2(a, rows, cols, dtype):
    """Zero-pad the last two dims of `a` up to (rows, cols) and cast."""
    pad = [(0, 0)] * (a.ndim - 2) + [(0, rows - a.shape[-2]), (0, cols - a.shape[-1])]
    return jnp.pad(a.astype(dtype), pad)


def _weight_spec(shape):
    """Grid-invariant full-array weight spec; single-buffered when supported.

    The index_map is constant across the grid, so double-buffering buys
    nothing -- Buffered(1) halves the weight VMEM footprint.
    """
    index_map = lambda i, _n=len(shape): (0,) * _n
    buffered = getattr(pl, "Buffered", None)
    if buffered is not None:
        try:
            return pl.BlockSpec(shape, index_map, pipeline_mode=buffered(buffer_count=1))
        except TypeError:
            pass  # older/newer API without pipeline_mode: fall back to default buffering
    return pl.BlockSpec(shape, index_map)


def _tcn_fused_kernel(*refs, layer_cfgs, bblk, t, t_pad, seg_pad, cmax, c_in,
                      n_weight_refs, chunk_rows):
    """Fused TCN forward for one block of `bblk` sequences.

    refs = (x_ref, *weight_refs, out_ref, act_buf, hid_buf)
      x_ref   : (bblk, t, c_in)   narrow (un-padded channel) input block
      weights : per layer w1 (K, cmax, cmax), b1 (1, cmax),
                          w2 (K, cmax, cmax), b2 (1, cmax),
                          [wd (cmax, cmax), bd (1, cmax)] if downsample
      out_ref : (bblk, t, cmax)   channel-padded output block
      act_buf : VMEM (bblk*S, cmax)  layer input/output activations
      hid_buf : VMEM (bblk*S, cmax)  hidden activations (after relu1)

    Segmented layout: each sequence occupies S = seg_pad + t_pad rows
    (seg_pad zero rows = shared causal left padding, t data rows, then
    t_pad - t dead rows so every segment start is sublane-aligned).  A dilated
    tap k then reads the buffer shifted by (k*d - p) rows for ALL sequences at
    once; rows that cross segments only affect discarded / re-zeroed pad rows.
    """
    x_ref = refs[0]
    w_refs = refs[1:1 + n_weight_refs]
    out_ref = refs[1 + n_weight_refs]
    act_buf = refs[2 + n_weight_refs]
    hid_buf = refs[3 + n_weight_refs]

    S = seg_pad + t_pad
    rt = bblk * S
    m = rt - seg_pad                       # conv outputs cover rows [seg_pad, rt)

    # static row chunks (all multiples of 8) to bound f32 accumulator vreg pressure
    chunks = [(cs, min(chunk_rows, m - cs)) for cs in range(0, m, chunk_rows)]

    zeros_seg = jnp.zeros((S, cmax), act_buf.dtype)
    zeros_pad = jnp.zeros((seg_pad, cmax), act_buf.dtype)

    # ---- load input block into the segmented layout ----
    # Zero the whole segment (causal pad + dead rows + padded channels), then
    # store the narrow (t, c_in) data into the first c_in lanes.
    for b in range(bblk):
        act_buf[pl.ds(b * S, S), :] = zeros_seg
        act_buf[pl.ds(b * S + seg_pad, t), pl.ds(0, c_in)] = x_ref[b]

    n_layers = len(layer_cfgs)
    wi = 0
    for li, cfg in enumerate(layer_cfgs):
        K = cfg["kernel_size"]
        d = cfg["dilation"]
        p = (K - 1) * d                     # this layer's causal padding (<= seg_pad)
        w1, b1, w2, b2 = w_refs[wi], w_refs[wi + 1], w_refs[wi + 2], w_refs[wi + 3]
        wi += 4
        if cfg["has_downsample"]:
            wd, bd = w_refs[wi], w_refs[wi + 1]
            wi += 2

        # ---- conv1 (causal dilated) -> relu, chunked over rows ----
        for cs, rows in chunks:
            r0 = seg_pad + cs
            acc = jnp.dot(act_buf[pl.ds(r0 - p, rows), :], w1[0],
                          preferred_element_type=jnp.float32)
            for k in range(1, K):
                acc = acc + jnp.dot(act_buf[pl.ds(r0 - p + k * d, rows), :], w1[k],
                                    preferred_element_type=jnp.float32)
            h = jnp.maximum(acc + b1[...], 0.0)
            hid_buf[pl.ds(r0, rows), :] = h.astype(hid_buf.dtype)

        # re-zero hid causal-pad rows (b=0 included: hid_buf scratch is uninitialized)
        for b in range(bblk):
            hid_buf[pl.ds(b * S, seg_pad), :] = zeros_pad

        # ---- conv2 -> relu -> (+ residual / 1x1 downsample) -> relu ----
        for cs, rows in chunks:
            r0 = seg_pad + cs
            acc2 = jnp.dot(hid_buf[pl.ds(r0 - p, rows), :], w2[0],
                           preferred_element_type=jnp.float32)
            for k in range(1, K):
                acc2 = acc2 + jnp.dot(hid_buf[pl.ds(r0 - p + k * d, rows), :], w2[k],
                                      preferred_element_type=jnp.float32)
            o = jnp.maximum(acc2 + b2[...], 0.0)
            x_res = act_buf[pl.ds(r0, rows), :]
            if cfg["has_downsample"]:
                res = jnp.dot(x_res, wd[...], preferred_element_type=jnp.float32) + bd[...]
            else:
                res = x_res.astype(jnp.float32)
            out = jnp.maximum(o + res, 0.0)
            # in-place is safe: later chunks only read act_buf rows >= their own r0
            act_buf[pl.ds(r0, rows), :] = out.astype(act_buf.dtype)

        if li != n_layers - 1:
            # restore the zero causal-pad rows that the full-width stores clobbered
            # (batch 0's leading pad rows were never written -> still zero).
            for b in range(1, bblk):
                act_buf[pl.ds(b * S, seg_pad), :] = zeros_pad

    # ---- emit lane-dense, per-sequence output ----
    for b in range(bblk):
        out_ref[b] = act_buf[pl.ds(b * S + seg_pad, t), :].astype(out_ref.dtype)


def tcn_forward(x_bct, params, kernel_size, *, compute_dtype=jnp.bfloat16,
                chunk_rows=256, vmem_budget_bytes=40 * 2**20):
    """PyTorch-facing forward: (B, C_in, T) f32 -> (B, channels[-1], T) f32.

    compute_dtype=bf16 by default (f32 accumulation).  Note: even with
    compute_dtype=f32, TPU matmuls multiply in bf16 passes unless
    precision=HIGHEST is requested, so bf16 activations cost little accuracy
    at inference (per-layer rounding only).
    """
    B, c_in, T = x_bct.shape
    n_layers = len(params)
    c_last = params[-1]["w1"].shape[2]
    itemsize = jnp.dtype(compute_dtype).itemsize

    # lane-dense channel width shared by all layers (multiple of 128)
    cmax = _round_up(max([c_in] + [p["w1"].shape[2] for p in params]), 128)
    # shared causal-pad rows + padded segment length, both sublane (8) aligned
    max_p = max((kernel_size - 1) * (2 ** i) for i in range(n_layers))
    seg_pad = _round_up(max_p, 8)
    t_pad = _round_up(T, 8)
    S = seg_pad + t_pad
    chunk_rows = max(8, _round_up(chunk_rows, 8))

    # ---- host-side packing: weights padded to cmax (weight_norm pre-folded) ----
    flat_w, layer_cfgs = [], []
    for i, p in enumerate(params):
        flat_w.append(_pad_last2(p["w1"], cmax, cmax, compute_dtype))
        flat_w.append(_pad_last2(p["b1"], 1, cmax, compute_dtype))
        flat_w.append(_pad_last2(p["w2"], cmax, cmax, compute_dtype))
        flat_w.append(_pad_last2(p["b2"], 1, cmax, compute_dtype))
        has_ds = "wd" in p
        if has_ds:
            flat_w.append(_pad_last2(p["wd"], cmax, cmax, compute_dtype))
            flat_w.append(_pad_last2(p["bd"], 1, cmax, compute_dtype))
        layer_cfgs.append(dict(kernel_size=kernel_size, dilation=2 ** i,
                               has_downsample=has_ds))
    w_bytes = sum(int(a.size) for a in flat_w) * itemsize

    # ---- explicit VMEM budget (binding resource on v7x's 64 MiB) ----
    def est_vmem(bb):
        rt_ = bb * S
        scratch = 2 * rt_ * cmax * itemsize                      # act_buf + hid_buf
        in_blk = 2 * bb * t_pad * _round_up(c_in, 128) * itemsize  # dbl-buffered input
        out_blk = 2 * bb * t_pad * cmax * itemsize                 # dbl-buffered output
        return scratch + in_blk + out_blk + w_bytes                # weights single-buffered

    # bblk: largest divisor of B with (a) >= 2 grid steps when B >= 2 (megacore /
    # pipeline overlap), (b) matmul M-rows ~>=128 when possible, (c) fits budget.
    m_target = max(1, -(-128 // S))
    cap = max(1, B // 2)
    feasible = [dv for dv in range(1, B + 1)
                if B % dv == 0 and dv <= cap and dv <= m_target
                and est_vmem(dv) <= vmem_budget_bytes]
    bblk = max(feasible) if feasible else 1
    rt = bblk * S
    vmem_limit = int(min(64 * 2**20,
                         max(32 * 2**20, int(est_vmem(bblk) * 1.25) + (2 << 20))))

    # input stays narrow in HBM: (B, T, c_in); widened into VMEM inside the kernel
    x = jnp.transpose(x_bct, (0, 2, 1)).astype(compute_dtype)

    in_specs = [pl.BlockSpec((bblk, T, c_in), lambda i: (i, 0, 0))]
    in_specs += [_weight_spec(a.shape) for a in flat_w]

    kernel = functools.partial(
        _tcn_fused_kernel,
        layer_cfgs=tuple(layer_cfgs), bblk=bblk, t=T, t_pad=t_pad, seg_pad=seg_pad,
        cmax=cmax, c_in=c_in, n_weight_refs=len(flat_w), chunk_rows=chunk_rows)

    # advisory cost estimate for the XLA scheduler
    flops = 0
    for cfg in layer_cfgs:
        flops += 2 * B * T * cmax * cmax * cfg["kernel_size"] * 2   # conv1 + conv2
        if cfg["has_downsample"]:
            flops += 2 * B * T * cmax * cmax
    bytes_accessed = (int(x.size) + B * T * cmax) * itemsize + w_bytes
    cost = pl.CostEstimate(flops=int(flops), transcendentals=0,
                           bytes_accessed=int(bytes_accessed))

    out = pl.pallas_call(
        kernel,
        out_shape=jax.ShapeDtypeStruct((B, T, cmax), compute_dtype),
        grid_spec=pltpu.PrefetchScalarGridSpec(
            num_scalar_prefetch=0,
            grid=(B // bblk,),
            in_specs=in_specs,
            out_specs=pl.BlockSpec((bblk, T, cmax), lambda i: (i, 0, 0)),
            scratch_shapes=[pltpu.VMEM((rt, cmax), compute_dtype),
                            pltpu.VMEM((rt, cmax), compute_dtype)],
        ),
        compiler_params=pltpu.CompilerParams(
            dimension_semantics=("parallel",),
            vmem_limit_bytes=vmem_limit),
        cost_estimate=cost,
    )(x, *flat_w)

    # un-pad channels, back to PyTorch layout (B, channels[-1], T)
    return jnp.transpose(out[:, :, :c_last], (0, 2, 1)).astype(jnp.float32)


def init_tcn_params(key, in_channels, channels, kernel_size):
    """Deterministic synthetic parameters.

    Conv weights stored tap-major as (K, Cin, Cout) so each tap is a matmul.
    Weight-norm at default init makes the effective weight equal the raw
    weight, so effective weights are initialized directly ~ N(0, 0.05).
    """
    params = []
    cin = in_channels
    for cout in channels:
        key, k1, k2, k3, kb1, kb2, kb3 = jax.random.split(key, 7)
        p = {
            "w1": 0.05 * jax.random.normal(k1, (kernel_size, cin, cout), jnp.float32),
            "b1": 0.05 * jax.random.normal(kb1, (1, cout), jnp.float32),
            "w2": 0.05 * jax.random.normal(k2, (kernel_size, cout, cout), jnp.float32),
            "b2": 0.05 * jax.random.normal(kb2, (1, cout), jnp.float32),
        }
        if cin != cout:
            p["wd"] = 0.05 * jax.random.normal(k3, (cin, cout), jnp.float32)
            p["bd"] = 0.05 * jax.random.normal(kb3, (1, cout), jnp.float32)
        params.append(p)
        cin = cout
    return params


def _tcn_reference(x_bct, params, kernel_size):
    """Pure-JAX reference of the same forward pass (for a sanity check)."""
    x = jnp.transpose(x_bct, (0, 2, 1)).astype(jnp.float32)     # (B, T, C)
    T = x.shape[1]
    for i, p in enumerate(params):
        d = 2 ** i
        pad = (kernel_size - 1) * d
        xp = jnp.pad(x, ((0, 0), (pad, 0), (0, 0)))
        h = sum(jnp.einsum("btc,cd->btd", xp[:, k * d:k * d + T, :], p["w1"][k])
                for k in range(kernel_size)) + p["b1"][0]
        h = jnp.maximum(h, 0.0)
        hp = jnp.pad(h, ((0, 0), (pad, 0), (0, 0)))
        o = sum(jnp.einsum("btc,cd->btd", hp[:, k * d:k * d + T, :], p["w2"][k])
                for k in range(kernel_size)) + p["b2"][0]
        o = jnp.maximum(o, 0.0)
        if "wd" in p:
            res = jnp.einsum("btc,cd->btd", x, p["wd"]) + p["bd"][0]
        else:
            res = x
        x = jnp.maximum(o + res, 0.0)
    return jnp.transpose(x, (0, 2, 1))


if __name__ == "__main__":
    key = jax.random.PRNGKey(0)
    k_x, k_p = jax.random.split(key)

    # Small shapes consistent with the module: (BS, in_channels, T)
    B, in_channels, T = 2, 4, 16
    channels = [8, 16]          # 2 TemporalBlocks, dilations 1 and 2
    kernel_size = 3

    x = jax.random.normal(k_x, (B, in_channels, T), jnp.float32)
    params = init_tcn_params(k_p, in_channels, channels, kernel_size)

    fwd = jax.jit(functools.partial(tcn_forward, kernel_size=kernel_size))
    out = jax.block_until_ready(fwd(x, params))
    assert out.shape == (B, channels[-1], T), out.shape

    ref = _tcn_reference(x, params, kernel_size)
    assert bool(jnp.all(jnp.isfinite(out)))
    # tolerance covers bf16 compute (f32 accumulation) vs f32 reference
    if not bool(jnp.allclose(out, ref, rtol=5e-2, atol=5e-2)):
        raise AssertionError("Pallas TCN output does not match reference")
    print("KERNEL_OK")
</pallas_src>

<mosaic_0001>
module attributes {stable_mosaic.version = 11 : i64} {
  func.func @_tcn_fused_kernel(%arg0: i32, %arg1: memref<1x16x4xbf16, #tpu.memory_space<vmem>>, %arg2: memref<3x128x128xbf16, #tpu.memory_space<vmem>>, %arg3: memref<1x128xbf16, #tpu.memory_space<vmem>>, %arg4: memref<3x128x128xbf16, #tpu.memory_space<vmem>>, %arg5: memref<1x128xbf16, #tpu.memory_space<vmem>>, %arg6: memref<128x128xbf16, #tpu.memory_space<vmem>>, %arg7: memref<1x128xbf16, #tpu.memory_space<vmem>>, %arg8: memref<3x128x128xbf16, #tpu.memory_space<vmem>>, %arg9: memref<1x128xbf16, #tpu.memory_space<vmem>>, %arg10: memref<3x128x128xbf16, #tpu.memory_space<vmem>>, %arg11: memref<1x128xbf16, #tpu.memory_space<vmem>>, %arg12: memref<128x128xbf16, #tpu.memory_space<vmem>>, %arg13: memref<1x128xbf16, #tpu.memory_space<vmem>>, %arg14: memref<1x16x128xbf16, #tpu.memory_space<vmem>>, %arg15: memref<24x128xbf16, #tpu.memory_space<vmem>>, %arg16: memref<24x128xbf16, #tpu.memory_space<vmem>>) attributes {dimension_semantics = [#tpu.dimension_semantics<parallel>], iteration_bounds = array<i64: 2>, scalar_prefetch = 0 : i64, scratch_operands = 2 : i64, tpu.core_type = #tpu.core_type<tc>, window_params = [{transform_indices = @transform_0, window_bounds = array<i64: 1, 16, 4>}, {pipeline_mode = #tpu.pipeline_mode<synchronous>, transform_indices = @transform_1, window_bounds = array<i64: 3, 128, 128>}, {pipeline_mode = #tpu.pipeline_mode<synchronous>, transform_indices = @transform_2, window_bounds = array<i64: 1, 128>}, {pipeline_mode = #tpu.pipeline_mode<synchronous>, transform_indices = @transform_3, window_bounds = array<i64: 3, 128, 128>}, {pipeline_mode = #tpu.pipeline_mode<synchronous>, transform_indices = @transform_4, window_bounds = array<i64: 1, 128>}, {pipeline_mode = #tpu.pipeline_mode<synchronous>, transform_indices = @transform_5, window_bounds = array<i64: 128, 128>}, {pipeline_mode = #tpu.pipeline_mode<synchronous>, transform_indices = @transform_6, window_bounds = array<i64: 1, 128>}, {pipeline_mode = #tpu.pipeline_mode<synchronous>, transform_indices = @transform_7, window_bounds = array<i64: 3, 128, 128>}, {pipeline_mode = #tpu.pipeline_mode<synchronous>, transform_indices = @transform_8, window_bounds = array<i64: 1, 128>}, {pipeline_mode = #tpu.pipeline_mode<synchronous>, transform_indices = @transform_9, window_bounds = array<i64: 3, 128, 128>}, {pipeline_mode = #tpu.pipeline_mode<synchronous>, transform_indices = @transform_10, window_bounds = array<i64: 1, 128>}, {pipeline_mode = #tpu.pipeline_mode<synchronous>, transform_indices = @transform_11, window_bounds = array<i64: 128, 128>}, {pipeline_mode = #tpu.pipeline_mode<synchronous>, transform_indices = @transform_12, window_bounds = array<i64: 1, 128>}, {transform_indices = @transform_13, window_bounds = array<i64: 1, 16, 128>}]} {
    %cst = arith.constant 0.000000e+00 : bf16
    %0 = vector.broadcast %cst : bf16 to vector<24x128xbf16>
    %cst_0 = arith.constant 0.000000e+00 : bf16
    %1 = vector.broadcast %cst_0 : bf16 to vector<8x128xbf16>
    %c0 = arith.constant 0 : index
    %c0_1 = arith.constant 0 : index
    %2 = vector.load %arg15[%c0, %c0_1] : memref<24x128xbf16, #tpu.memory_space<vmem>>, vector<24x128xbf16>
    tpu.vector_store %arg15[%c0, %c0_1], %0 {strides = array<i32>} : memref<24x128xbf16, #tpu.memory_space<vmem>>, vector<24x128xbf16>,
    %c0_2 = arith.constant 0 : index
    %c0_3 = arith.constant 0 : index
    %c0_4 = arith.constant 0 : index
    %3 = vector.load %arg1[%c0_2, %c0_3, %c0_4] : memref<1x16x4xbf16, #tpu.memory_space<vmem>>, vector<1x16x4xbf16>
    %4 = vector.shape_cast %3 : vector<1x16x4xbf16> to vector<16x4xbf16>
    %c8 = arith.constant 8 : index
    %c0_5 = arith.constant 0 : index
    %5 = vector.load %arg15[%c8, %c0_5] : memref<24x128xbf16, #tpu.memory_space<vmem>>, vector<16x4xbf16>
    tpu.vector_store %arg15[%c8, %c0_5], %4 {strides = array<i32>} : memref<24x128xbf16, #tpu.memory_space<vmem>>, vector<16x4xbf16>,
    %c6 = arith.constant 6 : index
    %c0_6 = arith.constant 0 : index
    %6 = vector.load %arg15[%c6, %c0_6] : memref<24x128xbf16, #tpu.memory_space<vmem>>, vector<16x128xbf16>
    %c0_7 = arith.constant 0 : index
    %c0_8 = arith.constant 0 : index
    %c0_9 = arith.constant 0 : index
    %7 = vector.load %arg2[%c0_7, %c0_8, %c0_9] : memref<3x128x128xbf16, #tpu.memory_space<vmem>>, vector<1x128x128xbf16>
    %8 = vector.shape_cast %7 : vector<1x128x128xbf16> to vector<128x128xbf16>
    %cst_10 = arith.constant dense<0.000000e+00> : vector<16x128xf32>
    %9 = tpu.matmul %6, %8, %cst_10 {dimension_numbers = #tpu.dot_dimension_numbers<[1], [0], [0], [1], [0, 0, 1, 1], [], []>} : vector<16x128xbf16>, vector<128x128xbf16>, vector<16x128xf32> -> vector<16x128xf32>
    %c7 = arith.constant 7 : index
    %c0_11 = arith.constant 0 : index
    %10 = vector.load %arg15[%c7, %c0_11] : memref<24x128xbf16, #tpu.memory_space<vmem>>, vector<16x128xbf16>
    %c1 = arith.constant 1 : index
    %c0_12 = arith.constant 0 : index
    %c0_13 = arith.constant 0 : index
    %11 = vector.load %arg2[%c1, %c0_12, %c0_13] : memref<3x128x128xbf16, #tpu.memory_space<vmem>>, vector<1x128x128xbf16>
    %12 = vector.shape_cast %11 : vector<1x128x128xbf16> to vector<128x128xbf16>
    %cst_14 = arith.constant dense<0.000000e+00> : vector<16x128xf32>
    %13 = tpu.matmul %10, %12, %cst_14 {dimension_numbers = #tpu.dot_dimension_numbers<[1], [0], [0], [1], [0, 0, 1, 1], [], []>} : vector<16x128xbf16>, vector<128x128xbf16>, vector<16x128xf32> -> vector<16x128xf32>
    %14 = arith.addf %9, %13 : vector<16x128xf32>
    %c8_15 = arith.constant 8 : index
    %c0_16 = arith.constant 0 : index
    %15 = vector.load %arg15[%c8_15, %c0_16] : memref<24x128xbf16, #tpu.memory_space<vmem>>, vector<16x128xbf16>
    %c2 = arith.constant 2 : index
    %c0_17 = arith.constant 0 : index
    %c0_18 = arith.constant 0 : index
    %16 = vector.load %arg2[%c2, %c0_17, %c0_18] : memref<3x128x128xbf16, #tpu.memory_space<vmem>>, vector<1x128x128xbf16>
    %17 = vector.shape_cast %16 : vector<1x128x128xbf16> to vector<128x128xbf16>
    %cst_19 = arith.constant dense<0.000000e+00> : vector<16x128xf32>
    %18 = tpu.matmul %15, %17, %cst_19 {dimension_numbers = #tpu.dot_dimension_numbers<[1], [0], [0], [1], [0, 0, 1, 1], [], []>} : vector<16x128xbf16>, vector<128x128xbf16>, vector<16x128xf32> -> vector<16x128xf32>
    %19 = arith.addf %14, %18 : vector<16x128xf32>
    %c0_20 = arith.constant 0 : index
    %c0_21 = arith.constant 0 : index
    %20 = vector.load %arg3[%c0_20, %c0_21] : memref<1x128xbf16, #tpu.memory_space<vmem>>, vector<1x128xbf16>
    %21 = arith.extf %20 : vector<1x128xbf16> to vector<1x128xf32>
    %22 = vector.broadcast %21 : vector<1x128xf32> to vector<16x128xf32>
    %23 = arith.addf %19, %22 : vector<16x128xf32>
    %cst_22 = arith.constant 0.000000e+00 : f32
    %24 = vector.broadcast %cst_22 : f32 to vector<16x128xf32>
    %25 = arith.maximumf %23, %24 : vector<16x128xf32>
    %26 = arith.truncf %25 : vector<16x128xf32> to vector<16x128xbf16>
    %c8_23 = arith.constant 8 : index
    %c0_24 = arith.constant 0 : index
    %27 = vector.load %arg16[%c8_23, %c0_24] : memref<24x128xbf16, #tpu.memory_space<vmem>>, vector<16x128xbf16>
    tpu.vector_store %arg16[%c8_23, %c0_24], %26 {strides = array<i32>} : memref<24x128xbf16, #tpu.memory_space<vmem>>, vector<16x128xbf16>,
    %c0_25 = arith.constant 0 : index
    %c0_26 = arith.constant 0 : index
    %28 = vector.load %arg16[%c0_25, %c0_26] : memref<24x128xbf16, #tpu.memory_space<vmem>>, vector<8x128xbf16>
    tpu.vector_store %arg16[%c0_25, %c0_26], %1 {strides = array<i32>} : memref<24x128xbf16, #tpu.memory_space<vmem>>, vector<8x128xbf16>,
    %c6_27 = arith.constant 6 : index
    %c0_28 = arith.constant 0 : index
    %29 = vector.load %arg16[%c6_27, %c0_28] : memref<24x128xbf16, #tpu.memory_space<vmem>>, vector<16x128xbf16>
    %c0_29 = arith.constant 0 : index
    %c0_30 = arith.constant 0 : index
    %c0_31 = arith.constant 0 : index
    %30 = vector.load %arg4[%c0_29, %c0_30, %c0_31] : memref<3x128x128xbf16, #tpu.memory_space<vmem>>, vector<1x128x128xbf16>
    %31 = vector.shape_cast %30 : vector<1x128x128xbf16> to vector<128x128xbf16>
    %cst_32 = arith.constant dense<0.000000e+00> : vector<16x128xf32>
    %32 = tpu.matmul %29, %31, %cst_32 {dimension_numbers = #tpu.dot_dimension_numbers<[1], [0], [0], [1], [0, 0, 1, 1], [], []>} : vector<16x128xbf16>, vector<128x128xbf16>, vector<16x128xf32> -> vector<16x128xf32>
    %c7_33 = arith.constant 7 : index
    %c0_34 = arith.constant 0 : index
    %33 = vector.load %arg16[%c7_33, %c0_34] : memref<24x128xbf16, #tpu.memory_space<vmem>>, vector<16x128xbf16>
    %c1_35 = arith.constant 1 : index
    %c0_36 = arith.constant 0 : index
    %c0_37 = arith.constant 0 : index
    %34 = vector.load %arg4[%c1_35, %c0_36, %c0_37] : memref<3x128x128xbf16, #tpu.memory_space<vmem>>, vector<1x128x128xbf16>
    %35 = vector.shape_cast %34 : vector<1x128x128xbf16> to vector<128x128xbf16>
    %cst_38 = arith.constant dense<0.000000e+00> : vector<16x128xf32>
    %36 = tpu.matmul %33, %35, %cst_38 {dimension_numbers = #tpu.dot_dimension_numbers<[1], [0], [0], [1], [0, 0, 1, 1], [], []>} : vector<16x128xbf16>, vector<128x128xbf16>, vector<16x128xf32> -> vector<16x128xf32>
    %37 = arith.addf %32, %36 : vector<16x128xf32>
    %c8_39 = arith.constant 8 : index
    %c0_40 = arith.constant 0 : index
    %38 = vector.load %arg16[%c8_39, %c0_40] : memref<24x128xbf16, #tpu.memory_space<vmem>>, vector<16x128xbf16>
    %c2_41 = arith.constant 2 : index
    %c0_42 = arith.constant 0 : index
    %c0_43 = arith.constant 0 : index
    %39 = vector.load %arg4[%c2_41, %c0_42, %c0_43] : memref<3x128x128xbf16, #tpu.memory_space<vmem>>, vector<1x128x128xbf16>
    %40 = vector.shape_cast %39 : vector<1x128x128xbf16> to vector<128x128xbf16>
    %cst_44 = arith.constant dense<0.000000e+00> : vector<16x128xf32>
    %41 = tpu.matmul %38, %40, %cst_44 {dimension_numbers = #tpu.dot_dimension_numbers<[1], [0], [0], [1], [0, 0, 1, 1], [], []>} : vector<16x128xbf16>, vector<128x128xbf16>, vector<16x128xf32> -> vector<16x128xf32>
    %42 = arith.addf %37, %41 : vector<16x128xf32>
    %c0_45 = arith.constant 0 : index
    %c0_46 = arith.constant 0 : index
    %43 = vector.load %arg5[%c0_45, %c0_46] : memref<1x128xbf16, #tpu.memory_space<vmem>>, vector<1x128xbf16>
    %44 = arith.extf %43 : vector<1x128xbf16> to vector<1x128xf32>
    %45 = vector.broadcast %44 : vector<1x128xf32> to vector<16x128xf32>
    %46 = arith.addf %42, %45 : vector<16x128xf32>
    %cst_47 = arith.constant 0.000000e+00 : f32
    %47 = vector.broadcast %cst_47 : f32 to vector<16x128xf32>
    %48 = arith.maximumf %46, %47 : vector<16x128xf32>
    %c8_48 = arith.constant 8 : index
    %c0_49 = arith.constant 0 : index
    %49 = vector.load %arg15[%c8_48, %c0_49] : memref<24x128xbf16, #tpu.memory_space<vmem>>, vector<16x128xbf16>
    %c0_50 = arith.constant 0 : index
    %c0_51 = arith.constant 0 : index
    %50 = vector.load %arg6[%c0_50, %c0_51] : memref<128x128xbf16, #tpu.memory_space<vmem>>, vector<128x128xbf16>
    %cst_52 = arith.constant dense<0.000000e+00> : vector<16x128xf32>
    %51 = tpu.matmul %49, %50, %cst_52 {dimension_numbers = #tpu.dot_dimension_numbers<[1], [0], [0], [1], [0, 0, 1, 1], [], []>} : vector<16x128xbf16>, vector<128x128xbf16>, vector<16x128xf32> -> vector<16x128xf32>
    %c0_53 = arith.constant 0 : index
    %c0_54 = arith.constant 0 : index
    %52 = vector.load %arg7[%c0_53, %c0_54] : memref<1x128xbf16, #tpu.memory_space<vmem>>, vector<1x128xbf16>
    %53 = arith.extf %52 : vector<1x128xbf16> to vector<1x128xf32>
    %54 = vector.broadcast %53 : vector<1x128xf32> to vector<16x128xf32>
    %55 = arith.addf %51, %54 : vector<16x128xf32>
    %56 = arith.addf %48, %55 : vector<16x128xf32>
    %cst_55 = arith.constant 0.000000e+00 : f32
    %57 = vector.broadcast %cst_55 : f32 to vector<16x128xf32>
    %58 = arith.maximumf %56, %57 : vector<16x128xf32>
    %59 = arith.truncf %58 : vector<16x128xf32> to vector<16x128xbf16>
    %c8_56 = arith.constant 8 : index
    %c0_57 = arith.constant 0 : index
    %60 = vector.load %arg15[%c8_56, %c0_57] : memref<24x128xbf16, #tpu.memory_space<vmem>>, vector<16x128xbf16>
    tpu.vector_store %arg15[%c8_56, %c0_57], %59 {strides = array<i32>} : memref<24x128xbf16, #tpu.memory_space<vmem>>, vector<16x128xbf16>,
    %c4 = arith.constant 4 : index
    %c0_58 = arith.constant 0 : index
    %61 = vector.load %arg15[%c4, %c0_58] : memref<24x128xbf16, #tpu.memory_space<vmem>>, vector<16x128xbf16>
    %c0_59 = arith.constant 0 : index
    %c0_60 = arith.constant 0 : index
    %c0_61 = arith.constant 0 : index
    %62 = vector.load %arg8[%c0_59, %c0_60, %c0_61] : memref<3x128x128xbf16, #tpu.memory_space<vmem>>, vector<1x128x128xbf16>
    %63 = vector.shape_cast %62 : vector<1x128x128xbf16> to vector<128x128xbf16>
    %cst_62 = arith.constant dense<0.000000e+00> : vector<16x128xf32>
    %64 = tpu.matmul %61, %63, %cst_62 {dimension_numbers = #tpu.dot_dimension_numbers<[1], [0], [0], [1], [0, 0, 1, 1], [], []>} : vector<16x128xbf16>, vector<128x128xbf16>, vector<16x128xf32> -> vector<16x128xf32>
    %c6_63 = arith.constant 6 : index
    %c0_64 = arith.constant 0 : index
    %65 = vector.load %arg15[%c6_63, %c0_64] : memref<24x128xbf16, #tpu.memory_space<vmem>>, vector<16x128xbf16>
    %c1_65 = arith.constant 1 : index
    %c0_66 = arith.constant 0 : index
    %c0_67 = arith.constant 0 : index
    %66 = vector.load %arg8[%c1_65, %c0_66, %c0_67] : memref<3x128x128xbf16, #tpu.memory_space<vmem>>, vector<1x128x128xbf16>
    %67 = vector.shape_cast %66 : vector<1x128x128xbf16> to vector<128x128xbf16>
    %cst_68 = arith.constant dense<0.000000e+00> : vector<16x128xf32>
    %68 = tpu.matmul %65, %67, %cst_68 {dimension_numbers = #tpu.dot_dimension_numbers<[1], [0], [0], [1], [0, 0, 1, 1], [], []>} : vector<16x128xbf16>, vector<128x128xbf16>, vector<16x128xf32> -> vector<16x128xf32>
    %69 = arith.addf %64, %68 : vector<16x128xf32>
    %c8_69 = arith.constant 8 : index
    %c0_70 = arith.constant 0 : index
    %70 = vector.load %arg15[%c8_69, %c0_70] : memref<24x128xbf16, #tpu.memory_space<vmem>>, vector<16x128xbf16>
    %c2_71 = arith.constant 2 : index
    %c0_72 = arith.constant 0 : index
    %c0_73 = arith.constant 0 : index
    %71 = vector.load %arg8[%c2_71, %c0_72, %c0_73] : memref<3x128x128xbf16, #tpu.memory_space<vmem>>, vector<1x128x128xbf16>
    %72 = vector.shape_cast %71 : vector<1x128x128xbf16> to vector<128x128xbf16>
    %cst_74 = arith.constant dense<0.000000e+00> : vector<16x128xf32>
    %73 = tpu.matmul %70, %72, %cst_74 {dimension_numbers = #tpu.dot_dimension_numbers<[1], [0], [0], [1], [0, 0, 1, 1], [], []>} : vector<16x128xbf16>, vector<128x128xbf16>, vector<16x128xf32> -> vector<16x128xf32>
    %74 = arith.addf %69, %73 : vector<16x128xf32>
    %c0_75 = arith.constant 0 : index
    %c0_76 = arith.constant 0 : index
    %75 = vector.load %arg9[%c0_75, %c0_76] : memref<1x128xbf16, #tpu.memory_space<vmem>>, vector<1x128xbf16>
    %76 = arith.extf %75 : vector<1x128xbf16> to vector<1x128xf32>
    %77 = vector.broadcast %76 : vector<1x128xf32> to vector<16x128xf32>
    %78 = arith.addf %74, %77 : vector<16x128xf32>
    %cst_77 = arith.constant 0.000000e+00 : f32
    %79 = vector.broadcast %cst_77 : f32 to vector<16x128xf32>
    %80 = arith.maximumf %78, %79 : vector<16x128xf32>
    %81 = arith.truncf %80 : vector<16x128xf32> to vector<16x128xbf16>
    %c8_78 = arith.constant 8 : index
    %c0_79 = arith.constant 0 : index
    %82 = vector.load %arg16[%c8_78, %c0_79] : memref<24x128xbf16, #tpu.memory_space<vmem>>, vector<16x128xbf16>
    tpu.vector_store %arg16[%c8_78, %c0_79], %81 {strides = array<i32>} : memref<24x128xbf16, #tpu.memory_space<vmem>>, vector<16x128xbf16>,
    %c0_80 = arith.constant 0 : index
    %c0_81 = arith.constant 0 : index
    %83 = vector.load %arg16[%c0_80, %c0_81] : memref<24x128xbf16, #tpu.memory_space<vmem>>, vector<8x128xbf16>
    tpu.vector_store %arg16[%c0_80, %c0_81], %1 {strides = array<i32>} : memref<24x128xbf16, #tpu.memory_space<vmem>>, vector<8x128xbf16>,
    %c4_82 = arith.constant 4 : index
    %c0_83 = arith.constant 0 : index
    %84 = vector.load %arg16[%c4_82, %c0_83] : memref<24x128xbf16, #tpu.memory_space<vmem>>, vector<16x128xbf16>
    %c0_84 = arith.constant 0 : index
    %c0_85 = arith.constant 0 : index
    %c0_86 = arith.constant 0 : index
    %85 = vector.load %arg10[%c0_84, %c0_85, %c0_86] : memref<3x128x128xbf16, #tpu.memory_space<vmem>>, vector<1x128x128xbf16>
    %86 = vector.shape_cast %85 : vector<1x128x128xbf16> to vector<128x128xbf16>
    %cst_87 = arith.constant dense<0.000000e+00> : vector<16x128xf32>
    %87 = tpu.matmul %84, %86, %cst_87 {dimension_numbers = #tpu.dot_dimension_numbers<[1], [0], [0], [1], [0, 0, 1, 1], [], []>} : vector<16x128xbf16>, vector<128x128xbf16>, vector<16x128xf32> -> vector<16x128xf32>
    %c6_88 = arith.constant 6 : index
    %c0_89 = arith.constant 0 : index
    %88 = vector.load %arg16[%c6_88, %c0_89] : memref<24x128xbf16, #tpu.memory_space<vmem>>, vector<16x128xbf16>
    %c1_90 = arith.constant 1 : index
    %c0_91 = arith.constant 0 : index
    %c0_92 = arith.constant 0 : index
    %89 = vector.load %arg10[%c1_90, %c0_91, %c0_92] : memref<3x128x128xbf16, #tpu.memory_space<vmem>>, vector<1x128x128xbf16>
    %90 = vector.shape_cast %89 : vector<1x128x128xbf16> to vector<128x128xbf16>
    %cst_93 = arith.constant dense<0.000000e+00> : vector<16x128xf32>
    %91 = tpu.matmul %88, %90, %cst_93 {dimension_numbers = #tpu.dot_dimension_numbers<[1], [0], [0], [1], [0, 0, 1, 1], [], []>} : vector<16x128xbf16>, vector<128x128xbf16>, vector<16x128xf32> -> vector<16x128xf32>
    %92 = arith.addf %87, %91 : vector<16x128xf32>
    %c8_94 = arith.constant 8 : index
    %c0_95 = arith.constant 0 : index
    %93 = vector.load %arg16[%c8_94, %c0_95] : memref<24x128xbf16, #tpu.memory_space<vmem>>, vector<16x128xbf16>
    %c2_96 = arith.constant 2 : index
    %c0_97 = arith.constant 0 : index
    %c0_98 = arith.constant 0 : index
    %94 = vector.load %arg10[%c2_96, %c0_97, %c0_98] : memref<3x128x128xbf16, #tpu.memory_space<vmem>>, vector<1x128x128xbf16>
    %95 = vector.shape_cast %94 : vector<1x128x128xbf16> to vector<128x128xbf16>
    %cst_99 = arith.constant dense<0.000000e+00> : vector<16x128xf32>
    %96 = tpu.matmul %93, %95, %cst_99 {dimension_numbers = #tpu.dot_dimension_numbers<[1], [0], [0], [1], [0, 0, 1, 1], [], []>} : vector<16x128xbf16>, vector<128x128xbf16>, vector<16x128xf32> -> vector<16x128xf32>
    %97 = arith.addf %92, %96 : vector<16x128xf32>
    %c0_100 = arith.constant 0 : index
    %c0_101 = arith.constant 0 : index
    %98 = vector.load %arg11[%c0_100, %c0_101] : memref<1x128xbf16, #tpu.memory_space<vmem>>, vector<1x128xbf16>
    %99 = arith.extf %98 : vector<1x128xbf16> to vector<1x128xf32>
    %100 = vector.broadcast %99 : vector<1x128xf32> to vector<16x128xf32>
    %101 = arith.addf %97, %100 : vector<16x128xf32>
    %cst_102 = arith.constant 0.000000e+00 : f32
    %102 = vector.broadcast %cst_102 : f32 to vector<16x128xf32>
    %103 = arith.maximumf %101, %102 : vector<16x128xf32>
    %c8_103 = arith.constant 8 : index
    %c0_104 = arith.constant 0 : index
    %104 = vector.load %arg15[%c8_103, %c0_104] : memref<24x128xbf16, #tpu.memory_space<vmem>>, vector<16x128xbf16>
    %c0_105 = arith.constant 0 : index
    %c0_106 = arith.constant 0 : index
    %105 = vector.load %arg12[%c0_105, %c0_106] : memref<128x128xbf16, #tpu.memory_space<vmem>>, vector<128x128xbf16>
    %cst_107 = arith.constant dense<0.000000e+00> : vector<16x128xf32>
    %106 = tpu.matmul %104, %105, %cst_107 {dimension_numbers = #tpu.dot_dimension_numbers<[1], [0], [0], [1], [0, 0, 1, 1], [], []>} : vector<16x128xbf16>, vector<128x128xbf16>, vector<16x128xf32> -> vector<16x128xf32>
    %c0_108 = arith.constant 0 : index
    %c0_109 = arith.constant 0 : index
    %107 = vector.load %arg13[%c0_108, %c0_109] : memref<1x128xbf16, #tpu.memory_space<vmem>>, vector<1x128xbf16>
    %108 = arith.extf %107 : vector<1x128xbf16> to vector<1x128xf32>
    %109 = vector.broadcast %108 : vector<1x128xf32> to vector<16x128xf32>
    %110 = arith.addf %106, %109 : vector<16x128xf32>
    %111 = arith.addf %103, %110 : vector<16x128xf32>
    %cst_110 = arith.constant 0.000000e+00 : f32
    %112 = vector.broadcast %cst_110 : f32 to vector<16x128xf32>
    %113 = arith.maximumf %111, %112 : vector<16x128xf32>
    %114 = arith.truncf %113 : vector<16x128xf32> to vector<16x128xbf16>
    %c8_111 = arith.constant 8 : index
    %c0_112 = arith.constant 0 : index
    %115 = vector.load %arg15[%c8_111, %c0_112] : memref<24x128xbf16, #tpu.memory_space<vmem>>, vector<16x128xbf16>
    tpu.vector_store %arg15[%c8_111, %c0_112], %114 {strides = array<i32>} : memref<24x128xbf16, #tpu.memory_space<vmem>>, vector<16x128xbf16>,
    %c8_113 = arith.constant 8 : index
    %c0_114 = arith.constant 0 : index
    %116 = vector.load %arg15[%c8_113, %c0_114] : memref<24x128xbf16, #tpu.memory_space<vmem>>, vector<16x128xbf16>
    %c0_115 = arith.constant 0 : index
    %c0_116 = arith.constant 0 : index
    %c0_117 = arith.constant 0 : index
    %117 = vector.load %arg14[%c0_115, %c0_116, %c0_117] : memref<1x16x128xbf16, #tpu.memory_space<vmem>>, vector<1x16x128xbf16>
    %118 = vector.shape_cast %117 : vector<1x16x128xbf16> to vector<16x128xbf16>
    %119 = vector.shape_cast %116 : vector<16x128xbf16> to vector<1x16x128xbf16>
    tpu.vector_store %arg14[%c0_115, %c0_116, %c0_117], %119 {strides = array<i32>} : memref<1x16x128xbf16, #tpu.memory_space<vmem>>, vector<1x16x128xbf16>,
    return
  }
  func.func @transform_0(%arg0: i32) -> (i32, i32, i32) {
    %c0_i32 = arith.constant 0 : i32
    %c0_i32_0 = arith.constant 0 : i32
    %c0_i32_1 = arith.constant 0 : i32
    return %arg0, %c0_i32, %c0_i32_0 : i32, i32, i32
  }
  func.func @transform_1(%arg0: i32) -> (i32, i32, i32) {
    %c0_i32 = arith.constant 0 : i32
    %c0_i32_0 = arith.constant 0 : i32
    %c0_i32_1 = arith.constant 0 : i32
    %c0_i32_2 = arith.constant 0 : i32
    return %c0_i32, %c0_i32_0, %c0_i32_1 : i32, i32, i32
  }
  func.func @transform_2(%arg0: i32) -> (i32, i32) {
    %c0_i32 = arith.constant 0 : i32
    %c0_i32_0 = arith.constant 0 : i32
    %c0_i32_1 = arith.constant 0 : i32
    return %c0_i32, %c0_i32_0 : i32, i32
  }
  func.func @transform_3(%arg0: i32) -> (i32, i32, i32) {
    %c0_i32 = arith.constant 0 : i32
    %c0_i32_0 = arith.constant 0 : i32
    %c0_i32_1 = arith.constant 0 : i32
    %c0_i32_2 = arith.constant 0 : i32
    return %c0_i32, %c0_i32_0, %c0_i32_1 : i32, i32, i32
  }
  func.func @transform_4(%arg0: i32) -> (i32, i32) {
    %c0_i32 = arith.constant 0 : i32
    %c0_i32_0 = arith.constant 0 : i32
    %c0_i32_1 = arith.constant 0 : i32
    return %c0_i32, %c0_i32_0 : i32, i32
  }
  func.func @transform_5(%arg0: i32) -> (i32, i32) {
    %c0_i32 = arith.constant 0 : i32
    %c0_i32_0 = arith.constant 0 : i32
    %c0_i32_1 = arith.constant 0 : i32
    return %c0_i32, %c0_i32_0 : i32, i32
  }
  func.func @transform_6(%arg0: i32) -> (i32, i32) {
    %c0_i32 = arith.constant 0 : i32
    %c0_i32_0 = arith.constant 0 : i32
    %c0_i32_1 = arith.constant 0 : i32
    return %c0_i32, %c0_i32_0 : i32, i32
  }
  func.func @transform_7(%arg0: i32) -> (i32, i32, i32) {
    %c0_i32 = arith.constant 0 : i32
    %c0_i32_0 = arith.constant 0 : i32
    %c0_i32_1 = arith.constant 0 : i32
    %c0_i32_2 = arith.constant 0 : i32
    return %c0_i32, %c0_i32_0, %c0_i32_1 : i32, i32, i32
  }
  func.func @transform_8(%arg0: i32) -> (i32, i32) {
    %c0_i32 = arith.constant 0 : i32
    %c0_i32_0 = arith.constant 0 : i32
    %c0_i32_1 = arith.constant 0 : i32
    return %c0_i32, %c0_i32_0 : i32, i32
  }
  func.func @transform_9(%arg0: i32) -> (i32, i32, i32) {
    %c0_i32 = arith.constant 0 : i32
    %c0_i32_0 = arith.constant 0 : i32
    %c0_i32_1 = arith.constant 0 : i32
    %c0_i32_2 = arith.constant 0 : i32
    return %c0_i32, %c0_i32_0, %c0_i32_1 : i32, i32, i32
  }
  func.func @transform_10(%arg0: i32) -> (i32, i32) {
    %c0_i32 = arith.constant 0 : i32
    %c0_i32_0 = arith.constant 0 : i32
    %c0_i32_1 = arith.constant 0 : i32
    return %c0_i32, %c0_i32_0 : i32, i32
  }
  func.func @transform_11(%arg0: i32) -> (i32, i32) {
    %c0_i32 = arith.constant 0 : i32
    %c0_i32_0 = arith.constant 0 : i32
    %c0_i32_1 = arith.constant 0 : i32
    return %c0_i32, %c0_i32_0 : i32, i32
  }
  func.func @transform_12(%arg0: i32) -> (i32, i32) {
    %c0_i32 = arith.constant 0 : i32
    %c0_i32_0 = arith.constant 0 : i32
    %c0_i32_1 = arith.constant 0 : i32
    return %c0_i32, %c0_i32_0 : i32, i32
  }
  func.func @transform_13(%arg0: i32) -> (i32, i32, i32) {
    %c0_i32 = arith.constant 0 : i32
    %c0_i32_0 = arith.constant 0 : i32
    %c0_i32_1 = arith.constant 0 : i32
    return %arg0, %c0_i32, %c0_i32_0 : i32, i32, i32
  }
}

</mosaic_0001>

<llo_original>
// kernel: tcn_forward.1
$region0: #{tcn_forward.1}
  #allocation0 [shape = 'u32[]', space=smem, size = 0x4, offset = 0x4, fixed_abs, tag = 'smem constant byte address 0x4 - core index']
  #allocation1 [shape = 'u32[144,128]{1,0:T(1,128)}', space=vmem, size = 0x12000, scoped, tag = 'internal scratch']
  #allocation2 [shape = 'bf16[24,128]{1,0:T(8,128)(2,1)}', space=vmem, size = 0x1800, scoped, tag = 'scratch operand']
  #allocation3 [shape = 'bf16[24,128]{1,0:T(8,128)(2,1)}', space=vmem, size = 0x1800, scoped, tag = 'scratch operand']
  %s0 = inlined_call_operand.vmem [shape: bf16[2,16,4], index: 0, kind: input, shape index: {}]
  %s1 = inlined_call_operand.vmem [shape: bf16[3,128,128], index: 1, kind: input, shape index: {}]
  %s2 = inlined_call_operand.vmem [shape: bf16[1,128], index: 2, kind: input, shape index: {}]
  %s3 = inlined_call_operand.vmem [shape: bf16[3,128,128], index: 3, kind: input, shape index: {}]
  %s4 = inlined_call_operand.vmem [shape: bf16[1,128], index: 4, kind: input, shape index: {}]
  %s5 = inlined_call_operand.vmem [shape: bf16[128,128], index: 5, kind: input, shape index: {}]
  %s6 = inlined_call_operand.vmem [shape: bf16[1,128], index: 6, kind: input, shape index: {}]
  %s7 = inlined_call_operand.vmem [shape: bf16[3,128,128], index: 7, kind: input, shape index: {}]
  %s8 = inlined_call_operand.vmem [shape: bf16[1,128], index: 8, kind: input, shape index: {}]
  %s9 = inlined_call_operand.vmem [shape: bf16[3,128,128], index: 9, kind: input, shape index: {}]
  %s10 = inlined_call_operand.vmem [shape: bf16[1,128], index: 10, kind: input, shape index: {}]
  %s11 = inlined_call_operand.vmem [shape: bf16[128,128], index: 11, kind: input, shape index: {}]
  %s12 = inlined_call_operand.vmem [shape: bf16[1,128], index: 12, kind: input, shape index: {}]
  %s13 = inlined_call_operand.vmem [shape: bf16[2,16,128], index: 13, kind: output, shape index: {}]
  %s14 = sld [smem:[#allocation0]]
  $region85: #{tcn_forward.1} parent=0
    _
  %s16 = ssub.s32 1, %s14
  %s17 = scalar_select 0, %s16, %s14
  loop: start=0, step=1, limit=4
  $region2: #{tcn_forward.1} parent=0 // loop_pre_header
    _
  $region3: #{tcn_forward.1} parent=0 // loop_header
    %s19 = sphi 0, %s23
    %p20 = scmp.ge.s32.totalorder %s19, 4
    %s29 = sphi 0, %s31
    %s32 = sphi 0, %s29
    %s33 = sphi 0, %s32
    %s49 = sphi 0, %s33
    %s53 = sphi 0, %s53
    %s55 = sphi 0, %s53
    %s56 = sphi 0, %s55
    %s70 = sphi 0, %s56
    %s74 = sphi 0, %s74
    %s76 = sphi 0, %s74
    %s77 = sphi 0, %s76
    %s91 = sphi 0, %s77
    %s95 = sphi 0, %s95
    %s97 = sphi 0, %s95
    %s98 = sphi 0, %s97
    %s112 = sphi 0, %s98
    %s116 = sphi 0, %s116
    %s118 = sphi 0, %s116
    %s119 = sphi 0, %s118
    %s133 = sphi 0, %s119
    %s137 = sphi 0, %s137
    %s139 = sphi 0, %s137
    %s140 = sphi 0, %s139
    %s154 = sphi 0, %s140
    %s158 = sphi 0, %s158
    %s160 = sphi 0, %s158
    %s161 = sphi 0, %s160
    %s175 = sphi 0, %s161
    %s179 = sphi 0, %s179
    %s181 = sphi 0, %s179
    %s182 = sphi 0, %s181
    %s196 = sphi 0, %s182
    %s200 = sphi 0, %s200
    %s202 = sphi 0, %s200
    %s203 = sphi 0, %s202
    %s217 = sphi 0, %s203
    %s221 = sphi 0, %s221
    %s223 = sphi 0, %s221
    %s224 = sphi 0, %s223
    %s238 = sphi 0, %s224
    %s242 = sphi 0, %s242
    %s244 = sphi 0, %s242
    %s245 = sphi 0, %s244
    %s259 = sphi 0, %s245
    %s263 = sphi 0, %s263
    %s265 = sphi 0, %s263
    %s266 = sphi 0, %s265
    %s280 = sphi 0, %s266
    %s284 = sphi 0, %s284
    %s286 = sphi 0, %s284
    %s287 = sphi 0, %s286
    %s301 = sphi 0, %s287
    %s307 = sphi 0, %s309
    %s310 = sphi 0, %s307
    %s311 = sphi 0, %s310
    %s327 = sphi 0, %s311
  $region4: #{tcn_forward.1} parent=0 // loop_header_branch
    %22 = sbr.rel (%p20) target = $region8
  $region5: #{tcn_forward.1} parent=0 // loop_body
    %s24 = ssub.s32 %s19, 1
    %s25 = ssub.s32 %s19, 2
    %s26 = sadd.s32 %s19, 1
    %s27 = ssub.s32 %s19, %s26
    %p28 = scmp.eq.s32.totalorder %s27, 0
    %s30 = sadd.s32 %s29, 1
    %s31 = scalar_select %p28, %s29, %s30
    %p34 = pneg %p28
    %p35 = scmp.eq.s32.totalorder %s19, 1
    %p36 = por %p34, %p35
    %p37 = scmp.ne.s32.totalorder %s29, %s32
    %p38 = scmp.eq.s32.totalorder %s19, 0
    %p39 = por %p37, %p38
    %p40 = scmp.ne.s32.totalorder %s29, %s32
    %p41 = scmp.eq.s32.totalorder %s24, 1
    %p42 = por %p40, %p41
    %p43 = scmp.ne.s32.totalorder %s32, %s33
    %p44 = scmp.eq.s32.totalorder %s24, 0
    %p45 = por %p43, %p44
    %p46 = scmp.ne.s32.totalorder %s32, %s33
    %p47 = scmp.eq.s32.totalorder %s25, 1
    %p48 = por %p46, %p47
    %p50 = scmp.ne.s32.totalorder %s33, %s49
    %p51 = scmp.eq.s32.totalorder %s25, 0
    %p52 = por %p50, %p51
    %s54 = sadd.s32 %s53, 1
    %p57 = scmp.eq.s32.totalorder %s19, 1
    %p58 = scmp.ne.s32.totalorder %s53, %s55
    %p59 = scmp.eq.s32.totalorder %s19, 0
    %p60 = por %p58, %p59
    %p61 = scmp.ne.s32.totalorder %s53, %s55
    %p62 = scmp.eq.s32.totalorder %s24, 1
    %p63 = por %p61, %p62
    %p64 = scmp.ne.s32.totalorder %s55, %s56
    %p65 = scmp.eq.s32.totalorder %s24, 0
    %p66 = por %p64, %p65
    %p67 = scmp.ne.s32.totalorder %s55, %s56
    %p68 = scmp.eq.s32.totalorder %s25, 1
    %p69 = por %p67, %p68
    %p71 = scmp.ne.s32.totalorder %s56, %s70
    %p72 = scmp.eq.s32.totalorder %s25, 0
    %p73 = por %p71, %p72
    %s75 = sadd.s32 %s74, 1
    %p78 = scmp.eq.s32.totalorder %s19, 1
    %p79 = scmp.ne.s32.totalorder %s74, %s76
    %p80 = scmp.eq.s32.totalorder %s19, 0
    %p81 = por %p79, %p80
    %p82 = scmp.ne.s32.totalorder %s74, %s76
    %p83 = scmp.eq.s32.totalorder %s24, 1
    %p84 = por %p82, %p83
    %p85 = scmp.ne.s32.totalorder %s76, %s77
    %p86 = scmp.eq.s32.totalorder %s24, 0
    %p87 = por %p85, %p86
    %p88 = scmp.ne.s32.totalorder %s76, %s77
    %p89 = scmp.eq.s32.totalorder %s25, 1
    %p90 = por %p88, %p89
    %p92 = scmp.ne.s32.totalorder %s77, %s91
    %p93 = scmp.eq.s32.totalorder %s25, 0
    %p94 = por %p92, %p93
    %s96 = sadd.s32 %s95, 1
    %p99 = scmp.eq.s32.totalorder %s19, 1
    %p100 = scmp.ne.s32.totalorder %s95, %s97
    %p101 = scmp.eq.s32.totalorder %s19, 0
    %p102 = por %p100, %p101
    %p103 = scmp.ne.s32.totalorder %s95, %s97
    %p104 = scmp.eq.s32.totalorder %s24, 1
    %p105 = por %p103, %p104
    %p106 = scmp.ne.s32.totalorder %s97, %s98
    %p107 = scmp.eq.s32.totalorder %s24, 0
    %p108 = por %p106, %p107
    %p109 = scmp.ne.s32.totalorder %s97, %s98
    %p110 = scmp.eq.s32.totalorder %s25, 1
    %p111 = por %p109, %p110
    %p113 = scmp.ne.s32.totalorder %s98, %s112
    %p114 = scmp.eq.s32.totalorder %s25, 0
    %p115 = por %p113, %p114
    %s117 = sadd.s32 %s116, 1
    %p120 = scmp.eq.s32.totalorder %s19, 1
    %p121 = scmp.ne.s32.totalorder %s116, %s118
    %p122 = scmp.eq.s32.totalorder %s19, 0
    %p123 = por %p121, %p122
    %p124 = scmp.ne.s32.totalorder %s116, %s118
    %p125 = scmp.eq.s32.totalorder %s24, 1
    %p126 = por %p124, %p125
    %p127 = scmp.ne.s32.totalorder %s118, %s119
    %p128 = scmp.eq.s32.totalorder %s24, 0
    %p129 = por %p127, %p128
    %p130 = scmp.ne.s32.totalorder %s118, %s119
    %p131 = scmp.eq.s32.totalorder %s25, 1
    %p132 = por %p130, %p131
    %p134 = scmp.ne.s32.totalorder %s119, %s133
    %p135 = scmp.eq.s32.totalorder %s25, 0
    %p136 = por %p134, %p135
    %s138 = sadd.s32 %s137, 1
    %p141 = scmp.eq.s32.totalorder %s19, 1
    %p142 = scmp.ne.s32.totalorder %s137, %s139
    %p143 = scmp.eq.s32.totalorder %s19, 0
    %p144 = por %p142, %p143
    %p145 = scmp.ne.s32.totalorder %s137, %s139
    %p146 = scmp.eq.s32.totalorder %s24, 1
    %p147 = por %p145, %p146
    %p148 = scmp.ne.s32.totalorder %s139, %s140
    %p149 = scmp.eq.s32.totalorder %s24, 0
    %p150 = por %p148, %p149
    %p151 = scmp.ne.s32.totalorder %s139, %s140
    %p152 = scmp.eq.s32.totalorder %s25, 1
    %p153 = por %p151, %p152
    %p155 = scmp.ne.s32.totalorder %s140, %s154
    %p156 = scmp.eq.s32.totalorder %s25, 0
    %p157 = por %p155, %p156
    %s159 = sadd.s32 %s158, 1
    %p162 = scmp.eq.s32.totalorder %s19, 1
    %p163 = scmp.ne.s32.totalorder %s158, %s160
    %p164 = scmp.eq.s32.totalorder %s19, 0
    %p165 = por %p163, %p164
    %p166 = scmp.ne.s32.totalorder %s158, %s160
    %p167 = scmp.eq.s32.totalorder %s24, 1
    %p168 = por %p166, %p167
    %p169 = scmp.ne.s32.totalorder %s160, %s161
    %p170 = scmp.eq.s32.totalorder %s24, 0
    %p171 = por %p169, %p170
    %p172 = scmp.ne.s32.totalorder %s160, %s161
    %p173 = scmp.eq.s32.totalorder %s25, 1
    %p174 = por %p172, %p173
    %p176 = scmp.ne.s32.totalorder %s161, %s175
    %p177 = scmp.eq.s32.totalorder %s25, 0
    %p178 = por %p176, %p177
    %s180 = sadd.s32 %s179, 1
    %p183 = scmp.eq.s32.totalorder %s19, 1
    %p184 = scmp.ne.s32.totalorder %s179, %s181
    %p185 = scmp.eq.s32.totalorder %s19, 0
    %p186 = por %p184, %p185
    %p187 = scmp.ne.s32.totalorder %s179, %s181
    %p188 = scmp.eq.s32.totalorder %s24, 1
    %p189 = por %p187, %p188
    %p190 = scmp.ne.s32.totalorder %s181, %s182
    %p191 = scmp.eq.s32.totalorder %s24, 0
    %p192 = por %p190, %p191
    %p193 = scmp.ne.s32.totalorder %s181, %s182
    %p194 = scmp.eq.s32.totalorder %s25, 1
    %p195 = por %p193, %p194
    %p197 = scmp.ne.s32.totalorder %s182, %s196
    %p198 = scmp.eq.s32.totalorder %s25, 0
    %p199 = por %p197, %p198
    %s201 = sadd.s32 %s200, 1
    %p204 = scmp.eq.s32.totalorder %s19, 1
    %p205 = scmp.ne.s32.totalorder %s200, %s202
    %p206 = scmp.eq.s32.totalorder %s19, 0
    %p207 = por %p205, %p206
    %p208 = scmp.ne.s32.totalorder %s200, %s202
    %p209 = scmp.eq.s32.totalorder %s24, 1
    %p210 = por %p208, %p209
    %p211 = scmp.ne.s32.totalorder %s202, %s203
    %p212 = scmp.eq.s32.totalorder %s24, 0
    %p213 = por %p211, %p212
    %p214 = scmp.ne.s32.totalorder %s202, %s203
    %p215 = scmp.eq.s32.totalorder %s25, 1
    %p216 = por %p214, %p215
    %p218 = scmp.ne.s32.totalorder %s203, %s217
    %p219 = scmp.eq.s32.totalorder %s25, 0
    %p220 = por %p218, %p219
    %s222 = sadd.s32 %s221, 1
    %p225 = scmp.eq.s32.totalorder %s19, 1
    %p226 = scmp.ne.s32.totalorder %s221, %s223
    %p227 = scmp.eq.s32.totalorder %s19, 0
    %p228 = por %p226, %p227
    %p229 = scmp.ne.s32.totalorder %s221, %s223
    %p230 = scmp.eq.s32.totalorder %s24, 1
    %p231 = por %p229, %p230
    %p232 = scmp.ne.s32.totalorder %s223, %s224
    %p233 = scmp.eq.s32.totalorder %s24, 0
    %p234 = por %p232, %p233
    %p235 = scmp.ne.s32.totalorder %s223, %s224
    %p236 = scmp.eq.s32.totalorder %s25, 1
    %p237 = por %p235, %p236
    %p239 = scmp.ne.s32.totalorder %s224, %s238
    %p240 = scmp.eq.s32.totalorder %s25, 0
    %p241 = por %p239, %p240
    %s243 = sadd.s32 %s242, 1
    %p246 = scmp.eq.s32.totalorder %s19, 1
    %p247 = scmp.ne.s32.totalorder %s242, %s244
    %p248 = scmp.eq.s32.totalorder %s19, 0
    %p249 = por %p247, %p248
    %p250 = scmp.ne.s32.totalorder %s242, %s244
    %p251 = scmp.eq.s32.totalorder %s24, 1
    %p252 = por %p250, %p251
    %p253 = scmp.ne.s32.totalorder %s244, %s245
    %p254 = scmp.eq.s32.totalorder %s24, 0
    %p255 = por %p253, %p254
    %p256 = scmp.ne.s32.totalorder %s244, %s245
    %p257 = scmp.eq.s32.totalorder %s25, 1
    %p258 = por %p256, %p257
    %p260 = scmp.ne.s32.totalorder %s245, %s259
    %p261 = scmp.eq.s32.totalorder %s25, 0
    %p262 = por %p260, %p261
    %s264 = sadd.s32 %s263, 1
    %p267 = scmp.eq.s32.totalorder %s19, 1
    %p268 = scmp.ne.s32.totalorder %s263, %s265
    %p269 = scmp.eq.s32.totalorder %s19, 0
    %p270 = por %p268, %p269
    %p271 = scmp.ne.s32.totalorder %s263, %s265
    %p272 = scmp.eq.s32.totalorder %s24, 1
    %p273 = por %p271, %p272
    %p274 = scmp.ne.s32.totalorder %s265, %s266
    %p275 = scmp.eq.s32.totalorder %s24, 0
    %p276 = por %p274, %p275
    %p277 = scmp.ne.s32.totalorder %s265, %s266
    %p278 = scmp.eq.s32.totalorder %s25, 1
    %p279 = por %p277, %p278
    %p281 = scmp.ne.s32.totalorder %s266, %s280
    %p282 = scmp.eq.s32.totalorder %s25, 0
    %p283 = por %p281, %p282
    %s285 = sadd.s32 %s284, 1
    %p288 = scmp.eq.s32.totalorder %s19, 1
    %p289 = scmp.ne.s32.totalorder %s284, %s286
    %p290 = scmp.eq.s32.totalorder %s19, 0
    %p291 = por %p289, %p290
    %p292 = scmp.ne.s32.totalorder %s284, %s286
    %p293 = scmp.eq.s32.totalorder %s24, 1
    %p294 = por %p292, %p293
    %p295 = scmp.ne.s32.totalorder %s286, %s287
    %p296 = scmp.eq.s32.totalorder %s24, 0
    %p297 = por %p295, %p296
    %p298 = scmp.ne.s32.totalorder %s286, %s287
    %p299 = scmp.eq.s32.totalorder %s25, 1
    %p300 = por %p298, %p299
    %p302 = scmp.ne.s32.totalorder %s287, %s301
    %p303 = scmp.eq.s32.totalorder %s25, 0
    %p304 = por %p302, %p303
    %s305 = ssub.s32 %s19, %s26
    %p306 = scmp.eq.s32.totalorder %s305, 0
    %s308 = sadd.s32 %s307, 1
    %s309 = scalar_select %p306, %s307, %s308
    %p312 = pneg %p306
    %p313 = scmp.eq.s32.totalorder %s19, 1
    %p314 = por %p312, %p313
    %p315 = scmp.ne.s32.totalorder %s307, %s310
    %p316 = scmp.eq.s32.totalorder %s19, 0
    %p317 = por %p315, %p316
    %p318 = scmp.ne.s32.totalorder %s307, %s310
    %p319 = scmp.eq.s32.totalorder %s24, 1
    %p320 = por %p318, %p319
    %p321 = scmp.ne.s32.totalorder %s310, %s311
    %p322 = scmp.eq.s32.totalorder %s24, 0
    %p323 = por %p321, %p322
    %p324 = scmp.ne.s32.totalorder %s310, %s311
    %p325 = scmp.eq.s32.totalorder %s25, 1
    %p326 = por %p324, %p325
    %p328 = scmp.ne.s32.totalorder %s311, %s327
    %p329 = scmp.eq.s32.totalorder %s25, 0
    %p330 = por %p328, %p329
    %p331 = scmp.le.s32.totalorder 1, %s19
    %p332 = scmp.lt.s32.totalorder %s19, 3
    %p333 = pnand %p331, %p332
    %p334 = pneg %p333
    // Predicated region
    $region9: #{tcn_forward.1} parent=5 // pred_check
      _
    $region10: #{tcn_forward.1} parent=5 // pred_check_branch
      %336 = sbr.rel (%p333) target = $region12
    $region11: #{tcn_forward.1} parent=5 // pred_region
      %s337 = ssub.s32 %s19, 1
      // Predicated region
      $region13: #{tcn_forward.1} parent=11 // pred_check
        %p338 = pneg %p66
      $region14: #{tcn_forward.1} parent=11 // pred_check_branch
        %340 = sbr.rel (%p338) target = $region16
      $region15: #{tcn_forward.1} parent=11 // pred_region
        _
      $region16: #{tcn_forward.1} parent=11 // pred_fallthru
        _
      // Predicated region
      $region17: #{tcn_forward.1} parent=11 // pred_check
        %p341 = pneg %p87
      $region18: #{tcn_forward.1} parent=11 // pred_check_branch
        %343 = sbr.rel (%p341) target = $region20
      $region19: #{tcn_forward.1} parent=11 // pred_region
        _
      $region20: #{tcn_forward.1} parent=11 // pred_fallthru
        _
      // Predicated region
      $region21: #{tcn_forward.1} parent=11 // pred_check
        %p344 = pneg %p108
      $region22: #{tcn_forward.1} parent=11 // pred_check_branch
        %346 = sbr.rel (%p344) target = $region24
      $region23: #{tcn_forward.1} parent=11 // pred_region
        _
      $region24: #{tcn_forward.1} parent=11 // pred_fallthru
        _
      // Predicated region
      $region25: #{tcn_forward.1} parent=11 // pred_check
        %p347 = pneg %p129
      $region26: #{tcn_forward.1} parent=11 // pred_check_branch
        %349 = sbr.rel (%p347) target = $region28
      $region27: #{tcn_forward.1} parent=11 // pred_region
        _
      $region28: #{tcn_forward.1} parent=11 // pred_fallthru
        _
      // Predicated region
      $region29: #{tcn_forward.1} parent=11 // pred_check
        %p350 = pneg %p150
      $region30: #{tcn_forward.1} parent=11 // pred_check_branch
        %352 = sbr.rel (%p350) target = $region32
      $region31: #{tcn_forward.1} parent=11 // pred_region
        _
      $region32: #{tcn_forward.1} parent=11 // pred_fallthru
        _
      // Predicated region
      $region33: #{tcn_forward.1} parent=11 // pred_check
        %p353 = pneg %p171
      $region34: #{tcn_forward.1} parent=11 // pred_check_branch
        %355 = sbr.rel (%p353) target = $region36
      $region35: #{tcn_forward.1} parent=11 // pred_region
        _
      $region36: #{tcn_forward.1} parent=11 // pred_fallthru
        _
      // Predicated region
      $region37: #{tcn_forward.1} parent=11 // pred_check
        %p356 = pneg %p192
      $region38: #{tcn_forward.1} parent=11 // pred_check_branch
        %358 = sbr.rel (%p356) target = $region40
      $region39: #{tcn_forward.1} parent=11 // pred_region
        _
      $region40: #{tcn_forward.1} parent=11 // pred_fallthru
        _
      // Predicated region
      $region41: #{tcn_forward.1} parent=11 // pred_check
        %p359 = pneg %p213
      $region42: #{tcn_forward.1} parent=11 // pred_check_branch
        %361 = sbr.rel (%p359) target = $region44
      $region43: #{tcn_forward.1} parent=11 // pred_region
        _
      $region44: #{tcn_forward.1} parent=11 // pred_fallthru
        _
      // Predicated region
      $region45: #{tcn_forward.1} parent=11 // pred_check
        %p362 = pneg %p234
      $region46: #{tcn_forward.1} parent=11 // pred_check_branch
        %364 = sbr.rel (%p362) target = $region48
      $region47: #{tcn_forward.1} parent=11 // pred_region
        _
      $region48: #{tcn_forward.1} parent=11 // pred_fallthru
        _
      // Predicated region
      $region49: #{tcn_forward.1} parent=11 // pred_check
        %p365 = pneg %p255
      $region50: #{tcn_forward.1} parent=11 // pred_check_branch
        %367 = sbr.rel (%p365) target = $region52
      $region51: #{tcn_forward.1} parent=11 // pred_region
        _
      $region52: #{tcn_forward.1} parent=11 // pred_fallthru
        _
      // Predicated region
      $region53: #{tcn_forward.1} parent=11 // pred_check
        %p368 = pneg %p276
      $region54: #{tcn_forward.1} parent=11 // pred_check_branch
        %370 = sbr.rel (%p368) target = $region56
      $region55: #{tcn_forward.1} parent=11 // pred_region
        _
      $region56: #{tcn_forward.1} parent=11 // pred_fallthru
        _
      // Predicated region
      $region57: #{tcn_forward.1} parent=11 // pred_check
        %p371 = pneg %p297
      $region58: #{tcn_forward.1} parent=11 // pred_check_branch
        %373 = sbr.rel (%p371) target = $region60
      $region59: #{tcn_forward.1} parent=11 // pred_region
        _
      $region60: #{tcn_forward.1} parent=11 // pred_fallthru
        _
    $region12: #{tcn_forward.1} parent=5 // pred_fallthru
      _
    %p374 = scmp.lt.s32.totalorder %s19, 2
    // Predicated region
    $region61: #{tcn_forward.1} parent=5 // pred_check
      %p375 = pneg %p374
    $region62: #{tcn_forward.1} parent=5 // pred_check_branch
      %377 = sbr.rel (%p375) target = $region64
    $region63: #{tcn_forward.1} parent=5 // pred_region
      // Predicated region
      $region65: #{tcn_forward.1} parent=63 // pred_check
        %p378 = pneg %p39
      $region66: #{tcn_forward.1} parent=63 // pred_check_branch
        %380 = sbr.rel (%p378) target = $region68
      $region67: #{tcn_forward.1} parent=63 // pred_region
        %p381 = scmp.lt.s32.totalorder %s19, 1
        %s382 = scalar_select %p381, %s19, 1
        %s383 = smul.addr %s382, 2
        %s384 = smul.addr %s383, 4
        %s385 = scalar_lea.vmem %s0, %s384
      $region68: #{tcn_forward.1} parent=63 // pred_fallthru
        _
    $region64: #{tcn_forward.1} parent=5 // pred_fallthru
      _
    %p386 = scmp.le.s32.totalorder 1, %s19
    %p387 = scmp.lt.s32.totalorder %s19, 3
    %p388 = pnand %p386, %p387
    %p389 = pneg %p388
    // Predicated region
    $region69: #{tcn_forward.1} parent=5 // pred_check
      _
    $region70: #{tcn_forward.1} parent=5 // pred_check_branch
      %391 = sbr.rel (%p388) target = $region72
    $region71: #{tcn_forward.1} parent=5 // pred_region
      %s392 = ssub.s32 %s19, 1
      %p393 = scmp.lt.s32.totalorder %s24, 1
      %s394 = scalar_select %p393, %s24, 1
      %s395 = smul.addr %s394, 2
      %s396 = smul.addr %s395, 4
      %s397 = scalar_lea.vmem %s0, %s396
      %p398 = pneg %p45
      %p399 = pneg %p42
      %p400 = pneg %p66
      %p401 = pneg %p63
      %p402 = pneg %p87
      %p403 = pneg %p84
      %p404 = pneg %p108
      %p405 = pneg %p105
      %p406 = pneg %p129
      %p407 = pneg %p126
      %p408 = pneg %p150
      %p409 = pneg %p147
      %p410 = pneg %p171
      %p411 = pneg %p168
      %p412 = pneg %p192
      %p413 = pneg %p189
      %p414 = pneg %p213
      %p415 = pneg %p210
      %p416 = pneg %p234
      %p417 = pneg %p231
      %p418 = pneg %p255
      %p419 = pneg %p252
      %p420 = pneg %p276
      %p421 = pneg %p273
      %p422 = pneg %p297
      %p423 = pneg %p294
      %p424 = pneg %p323
      %p425 = pneg %p320
      %p426 = scmp.lt.s32.totalorder %s24, 1
      %s427 = scalar_select %p426, %s24, 1
      %s428 = smul.addr %s427, 2
      %s429 = smul.addr %s428, 4
      %s430 = scalar_lea.vmem %s13, %s429
      %p431 = scmp.lt.s32.totalorder %s24, 1
      %s432 = scalar_select %p431, %s24, 1
      %s433 = smul.addr %s432, 2
      %s434 = smul.addr %s433, 4
      %s435 = scalar_lea.vmem %s0, %s434
      %p436 = scmp.lt.s32.totalorder %s24, 1
      %s437 = scalar_select %p436, %s24, 1
      %s438 = smul.addr %s437, 2
      %s439 = smul.addr %s438, 4
      %s440 = scalar_lea.vmem %s13, %s439
      %442 = vst [vmem:[#allocation2] sm:$0xf] 0
      %443 = vst [vmem:[#allocation2 + $0x4] sm:$0xf] 0
      %444 = vst [vmem:[#allocation2 + $0x8] sm:$0xf] 0
      %v445 = vld [vmem:[%s435] sm:$0xf]
      %v446 = vld [vmem:[%s435 + $0x4] sm:$0xf]
      %vm447 = vcmask 27648
      %448 = vst.msk [vmem:[#allocation2 + $0x4] sm:$0xf] %vm447, %v445
      %449 = vst.msk [vmem:[#allocation2 + $0x8] sm:$0xf] %vm447, %v446
      %v450 = vld [vmem:[#allocation2] sm:$0x8]
      %v451 = vld [vmem:[#allocation2 + $0x4] sm:$0xf]
      %v452 = vld [vmem:[#allocation2 + $0x8] sm:$0x7]
      %v453 = vld [vmem:[%s1] sm:$0xf]
      %v454 = vld [vmem:[%s1 + $0x4] sm:$0xf]
      %v455 = vld [vmem:[%s1 + $0x8] sm:$0xf]
      %v456 = vld [vmem:[%s1 + $0xc] sm:$0xf]
      %v457 = vld [vmem:[%s1 + $0x10] sm:$0xf]
      %v458 = vld [vmem:[%s1 + $0x14] sm:$0xf]
      %v459 = vld [vmem:[%s1 + $0x18] sm:$0xf]
      %v460 = vld [vmem:[%s1 + $0x1c] sm:$0xf]
      %v461 = vld [vmem:[%s1 + $0x20] sm:$0xf]
      %v462 = vld [vmem:[%s1 + $0x24] sm:$0xf]
      %v463 = vld [vmem:[%s1 + $0x28] sm:$0xf]
      %v464 = vld [vmem:[%s1 + $0x2c] sm:$0xf]
      %v465 = vld [vmem:[%s1 + $0x30] sm:$0xf]
      %v466 = vld [vmem:[%s1 + $0x34] sm:$0xf]
      %v467 = vld [vmem:[%s1 + $0x38] sm:$0xf]
      %v468 = vld [vmem:[%s1 + $0x3c] sm:$0xf]
      %v469 = vld [vmem:[#allocation2 + $0x8] sm:$0xf]
      %s470 = scalar_lea.vmem %s1, 64
      %v471 = vld [vmem:[%s470] sm:$0xf]
      %v472 = vld [vmem:[%s470 + $0x4] sm:$0xf]
      %v473 = vld [vmem:[%s470 + $0x8] sm:$0xf]
      %v474 = vld [vmem:[%s470 + $0xc] sm:$0xf]
      %v475 = vld [vmem:[%s470 + $0x10] sm:$0xf]
      %v476 = vld [vmem:[%s470 + $0x14] sm:$0xf]
      %v477 = vld [vmem:[%s470 + $0x18] sm:$0xf]
      %v478 = vld [vmem:[%s470 + $0x1c] sm:$0xf]
      %v479 = vld [vmem:[%s470 + $0x20] sm:$0xf]
      %v480 = vld [vmem:[%s470 + $0x24] sm:$0xf]
      %v481 = vld [vmem:[%s470 + $0x28] sm:$0xf]
      %v482 = vld [vmem:[%s470 + $0x2c] sm:$0xf]
      %v483 = vld [vmem:[%s470 + $0x30] sm:$0xf]
      %v484 = vld [vmem:[%s470 + $0x34] sm:$0xf]
      %v485 = vld [vmem:[%s470 + $0x38] sm:$0xf]
      %v486 = vld [vmem:[%s470 + $0x3c] sm:$0xf]
      %v490 = vunpack.c.l.b16 %v450
      %v491 = vunpack.c.l.b16 %v451
      %v492 = vunpack.c.l.b16 %v469
      %v493 = vpack.c.b16 %v491, %v490
      %v494 = vpack.c.b16 %v492, %v492
      %vm495 = vsmask.f32 4352
      %v497 = vshrl.u32 %v493, 16
      %v499 = vrot.slane %v497, 3
      %v500 = vshll.u32 %v493, 16
      %v502 = vrot.slane %v500, 4
      %v503 = vor.u32 %v499, %v502
      %v505 = vshrl.u32 %v494, 16
      %v507 = vrot.slane %v505, 3
      %v508 = vshll.u32 %v494, 16
      %v510 = vrot.slane %v508, 4
      %v511 = vor.u32 %v507, %v510
      %v512 = vsel %vm495, %v503, %v511
      %v530 = vunpack.c.l.b16 %v471
      %v531 = vunpack.c.l.b16 %v472
      %v532 = vunpack.c.l.b16 %v473
      %v533 = vunpack.c.l.b16 %v474
      %v534 = vunpack.c.l.b16 %v475
      %v535 = vunpack.c.l.b16 %v476
      %v536 = vunpack.c.l.b16 %v477
      %v537 = vunpack.c.l.b16 %v478
      %v538 = vunpack.c.l.b16 %v479
      %v539 = vunpack.c.l.b16 %v480
      %v540 = vunpack.c.l.b16 %v481
      %v541 = vunpack.c.l.b16 %v482
      %v542 = vunpack.c.l.b16 %v483
      %v543 = vunpack.c.l.b16 %v484
      %v544 = vunpack.c.l.b16 %v485
      %v545 = vunpack.c.l.b16 %v486
      %v546 = vpack.c.b16 %v531, %v530
      %v547 = vpack.c.b16 %v533, %v532
      %v548 = vpack.c.b16 %v535, %v534
      %v549 = vpack.c.b16 %v537, %v536
      %v550 = vpack.c.b16 %v539, %v538
      %v551 = vpack.c.b16 %v541, %v540
      %v552 = vpack.c.b16 %v543, %v542
      %v553 = vpack.c.b16 %v545, %v544
      %562 = vmatprep.subr.bf16.mxu0 0
      %563 = vmatpush1.bf16.msra.mxu0 %v553
      %564 = vmatprep.subr.bf16.mxu0 0
      %565 = vmatpush1.bf16.msra.mxu0 %v552
      %566 = vmatprep.subr.bf16.mxu0 0
      %567 = vmatpush1.bf16.msra.mxu0 %v551
      %568 = vmatprep.subr.bf16.mxu0 0
      %569 = vmatpush1.bf16.msra.mxu0 %v550
      %570 = vmatprep.subr.bf16.mxu0 0
      %571 = vmatpush1.bf16.msra.mxu0 %v549
      %572 = vmatprep.subr.bf16.mxu0 0
      %573 = vmatpush1.bf16.msra.mxu0 %v548
      %574 = vmatprep.subr.bf16.mxu0 0
      %575 = vmatpush1.bf16.msra.mxu0 %v547
      %576 = vmatprep.subr.bf16.mxu0 0
      %577 = vmatpush1.bf16.msra.mxu0 %v546
      %578 = vmatprep.subr.bf16.mxu0 0
      %579 = vmatpush2.bf16.msra.mxu0 0
      %580 = vmatprep.subr.bf16.mxu0 0
      %581 = vmatpush2.bf16.msra.mxu0 0
      %582 = vmatprep.subr.bf16.mxu0 0
      %583 = vmatpush2.bf16.msra.mxu0 0
      %584 = vmatprep.subr.bf16.mxu0 0
      %585 = vmatpush2.bf16.msra.mxu0 0
      %586 = vmatprep.subr.bf16.mxu0 0
      %587 = vmatpush2.bf16.msra.mxu0 0
      %588 = vmatprep.subr.bf16.mxu0 0
      %589 = vmatpush2.bf16.msra.mxu0 0
      %590 = vmatprep.subr.bf16.mxu0 0
      %591 = vmatpush2.bf16.msra.mxu0 0
      %592 = vmatprep.subr.bf16.mxu0 0
      %593 = vmatpush2.bf16.msra.mxu0 0
      %594 = vmatprep.mubr.bf16.mxu0 0
      %595 = vmatmul.mubr.bf16.gmra.mxu0 %v512
      %v596 = vpop.f32.mrf.mxu0
      %v597 = vadd.f32 0.0, %v596
      %v598 = vpop.f32.mrf.mxu0
      %v599 = vpop.f32.mrf.mxu0
      %v600 = vadd.f32 0.0, %v599
      %v601 = vpop.f32.mrf.mxu0
      %602 = vdwg.mxu0
      %v604 = vunpack.c.l.b16 %v452
      %v605 = vpack.c.b16 %v604, %v604
      %vm606 = vcmask 1044480
      %v607 = vrot.slane %v493, 3
      %v608 = vrot.slane %v605, 3
      %v609 = vsel %vm606, %v607, %v608
      %v627 = vunpack.c.l.b16 %v453
      %v628 = vunpack.c.l.b16 %v454
      %v629 = vunpack.c.l.b16 %v455
      %v630 = vunpack.c.l.b16 %v456
      %v631 = vunpack.c.l.b16 %v457
      %v632 = vunpack.c.l.b16 %v458
      %v633 = vunpack.c.l.b16 %v459
      %v634 = vunpack.c.l.b16 %v460
      %v635 = vunpack.c.l.b16 %v461
      %v636 = vunpack.c.l.b16 %v462
      %v637 = vunpack.c.l.b16 %v463
      %v638 = vunpack.c.l.b16 %v464
      %v639 = vunpack.c.l.b16 %v465
      %v640 = vunpack.c.l.b16 %v466
      %v641 = vunpack.c.l.b16 %v467
      %v642 = vunpack.c.l.b16 %v468
      %v643 = vpack.c.b16 %v628, %v627
      %v644 = vpack.c.b16 %v630, %v629
      %v645 = vpack.c.b16 %v632, %v631
      %v646 = vpack.c.b16 %v634, %v633
      %v647 = vpack.c.b16 %v636, %v635
      %v648 = vpack.c.b16 %v638, %v637
      %v649 = vpack.c.b16 %v640, %v639
      %v650 = vpack.c.b16 %v642, %v641
      %659 = vmatprep.subr.bf16.mxu0 0
      %660 = vmatpush1.bf16.msra.mxu0 %v650
      %661 = vmatprep.subr.bf16.mxu0 0
      %662 = vmatpush1.bf16.msra.mxu0 %v649
      %663 = vmatprep.subr.bf16.mxu0 0
      %664 = vmatpush1.bf16.msra.mxu0 %v648
      %665 = vmatprep.subr.bf16.mxu0 0
      %666 = vmatpush1.bf16.msra.mxu0 %v647
      %667 = vmatprep.subr.bf16.mxu0 0
      %668 = vmatpush1.bf16.msra.mxu0 %v646
      %669 = vmatprep.subr.bf16.mxu0 0
      %670 = vmatpush1.bf16.msra.mxu0 %v645
      %671 = vmatprep.subr.bf16.mxu0 0
      %672 = vmatpush1.bf16.msra.mxu0 %v644
      %673 = vmatprep.subr.bf16.mxu0 0
      %674 = vmatpush1.bf16.msra.mxu0 %v643
      %675 = vmatprep.subr.bf16.mxu0 0
      %676 = vmatpush2.bf16.msra.mxu0 0
      %677 = vmatprep.subr.bf16.mxu0 0
      %678 = vmatpush2.bf16.msra.mxu0 0
      %679 = vmatprep.subr.bf16.mxu0 0
      %680 = vmatpush2.bf16.msra.mxu0 0
      %681 = vmatprep.subr.bf16.mxu0 0
      %682 = vmatpush2.bf16.msra.mxu0 0
      %683 = vmatprep.subr.bf16.mxu0 0
      %684 = vmatpush2.bf16.msra.mxu0 0
      %685 = vmatprep.subr.bf16.mxu0 0
      %686 = vmatpush2.bf16.msra.mxu0 0
      %687 = vmatprep.subr.bf16.mxu0 0
      %688 = vmatpush2.bf16.msra.mxu0 0
      %689 = vmatprep.subr.bf16.mxu0 0
      %690 = vmatpush2.bf16.msra.mxu0 0
      %691 = vmatprep.mubr.bf16.mxu0 0
      %692 = vmatmul.mubr.bf16.gmra.mxu0 %v609
      %v693 = vpop.f32.mrf.mxu0
      %v694 = vadd.f32 %v597, %v693
      %v695 = vpop.f32.mrf.mxu0
      %v696 = vpop.f32.mrf.mxu0
      %v697 = vadd.f32 %v600, %v696
      %v698 = vpop.f32.mrf.mxu0
      %699 = vdwg.mxu0
      %s700 = scalar_lea.vmem %s1, 128
      %v701 = vld [vmem:[%s700] sm:$0xf]
      %v702 = vld [vmem:[%s700 + $0x4] sm:$0xf]
      %v703 = vld [vmem:[%s700 + $0x8] sm:$0xf]
      %v704 = vld [vmem:[%s700 + $0xc] sm:$0xf]
      %v705 = vld [vmem:[%s700 + $0x10] sm:$0xf]
      %v706 = vld [vmem:[%s700 + $0x14] sm:$0xf]
      %v707 = vld [vmem:[%s700 + $0x18] sm:$0xf]
      %v708 = vld [vmem:[%s700 + $0x1c] sm:$0xf]
      %v709 = vld [vmem:[%s700 + $0x20] sm:$0xf]
      %v710 = vld [vmem:[%s700 + $0x24] sm:$0xf]
      %v711 = vld [vmem:[%s700 + $0x28] sm:$0xf]
      %v712 = vld [vmem:[%s700 + $0x2c] sm:$0xf]
      %v713 = vld [vmem:[%s700 + $0x30] sm:$0xf]
      %v714 = vld [vmem:[%s700 + $0x34] sm:$0xf]
      %v715 = vld [vmem:[%s700 + $0x38] sm:$0xf]
      %v716 = vld [vmem:[%s700 + $0x3c] sm:$0xf]
      %v717 = vpack.c.b16 %v492, %v491
      %v735 = vunpack.c.l.b16 %v701
      %v736 = vunpack.c.l.b16 %v702
      %v737 = vunpack.c.l.b16 %v703
      %v738 = vunpack.c.l.b16 %v704
      %v739 = vunpack.c.l.b16 %v705
      %v740 = vunpack.c.l.b16 %v706
      %v741 = vunpack.c.l.b16 %v707
      %v742 = vunpack.c.l.b16 %v708
      %v743 = vunpack.c.l.b16 %v709
      %v744 = vunpack.c.l.b16 %v710
      %v745 = vunpack.c.l.b16 %v711
      %v746 = vunpack.c.l.b16 %v712
      %v747 = vunpack.c.l.b16 %v713
      %v748 = vunpack.c.l.b16 %v714
      %v749 = vunpack.c.l.b16 %v715
      %v750 = vunpack.c.l.b16 %v716
      %v751 = vpack.c.b16 %v736, %v735
      %v752 = vpack.c.b16 %v738, %v737
      %v753 = vpack.c.b16 %v740, %v739
      %v754 = vpack.c.b16 %v742, %v741
      %v755 = vpack.c.b16 %v744, %v743
      %v756 = vpack.c.b16 %v746, %v745
      %v757 = vpack.c.b16 %v748, %v747
      %v758 = vpack.c.b16 %v750, %v749
      %767 = vmatprep.subr.bf16.mxu0 0
      %768 = vmatpush1.bf16.msra.mxu0 %v758
      %769 = vmatprep.subr.bf16.mxu0 0
      %770 = vmatpush1.bf16.msra.mxu0 %v757
      %771 = vmatprep.subr.bf16.mxu0 0
      %772 = vmatpush1.bf16.msra.mxu0 %v756
      %773 = vmatprep.subr.bf16.mxu0 0
      %774 = vmatpush1.bf16.msra.mxu0 %v755
      %775 = vmatprep.subr.bf16.mxu0 0
      %776 = vmatpush1.bf16.msra.mxu0 %v754
      %777 = vmatprep.subr.bf16.mxu0 0
      %778 = vmatpush1.bf16.msra.mxu0 %v753
      %779 = vmatprep.subr.bf16.mxu0 0
      %780 = vmatpush1.bf16.msra.mxu0 %v752
      %781 = vmatprep.subr.bf16.mxu0 0
      %782 = vmatpush1.bf16.msra.mxu0 %v751
      %783 = vmatprep.subr.bf16.mxu0 0
      %784 = vmatpush2.bf16.msra.mxu0 0
      %785 = vmatprep.subr.bf16.mxu0 0
      %786 = vmatpush2.bf16.msra.mxu0 0
      %787 = vmatprep.subr.bf16.mxu0 0
      %788 = vmatpush2.bf16.msra.mxu0 0
      %789 = vmatprep.subr.bf16.mxu0 0
      %790 = vmatpush2.bf16.msra.mxu0 0
      %791 = vmatprep.subr.bf16.mxu0 0
      %792 = vmatpush2.bf16.msra.mxu0 0
      %793 = vmatprep.subr.bf16.mxu0 0
      %794 = vmatpush2.bf16.msra.mxu0 0
      %795 = vmatprep.subr.bf16.mxu0 0
      %796 = vmatpush2.bf16.msra.mxu0 0
      %797 = vmatprep.subr.bf16.mxu0 0
      %798 = vmatpush2.bf16.msra.mxu0 0
      %799 = vmatprep.mubr.bf16.mxu0 0
      %800 = vmatmul.mubr.bf16.gmra.mxu0 %v717
      %v801 = vpop.f32.mrf.mxu0
      %v802 = vadd.f32 0.0, %v801
      %v803 = vpop.f32.mrf.mxu0
      %v804 = vpop.f32.mrf.mxu0
      %v805 = vadd.f32 0.0, %v804
      %v806 = vpop.f32.mrf.mxu0
      %807 = vdwg.mxu0
      %v808 = vadd.f32 %v694, %v802
      %v809 = vadd.f32 %v697, %v805
      %v810 = vld [vmem:[%s2] sm:$0x1]
      %v811 = vunpack.c.l.bf16 %v810
      %v812 = vlaneseq
      %v813 = vshrl.u32 %v812, 7
      %v814 = vsub.s32 0, %v813
      %v815 = vrot.slane %v811, %v814
      %v816 = vadd.f32 %v808, %v815
      %v817 = vadd.f32 %v809, %v815
      %v818 = vmax.f32 %v816, 0.0
      %v819 = vmax.f32 %v817, 0.0
      %v820 = vpack.c.bf16 %v819, %v818
      %v822 = vunpack.c.l.b16 %v820
      %v823 = vunpack.c.h.b16 %v820
      %v824 = vpack.c.b16 %v822, %v822
      %v825 = vpack.c.b16 %v823, %v823
      %828 = vst [vmem:[#allocation3 + $0x4] sm:$0xf] %v824
      %829 = vst [vmem:[#allocation3 + $0x8] sm:$0xf] %v825
      %830 = vst [vmem:[#allocation3] sm:$0xf] 0
      %v831 = vld [vmem:[#allocation3] sm:$0x8]
      %v832 = vld [vmem:[#allocation3 + $0x4] sm:$0xf]
      %v833 = vld [vmem:[#allocation3 + $0x8] sm:$0x7]
      %v834 = vld [vmem:[%s3] sm:$0xf]
      %v835 = vld [vmem:[%s3 + $0x4] sm:$0xf]
      %v836 = vld [vmem:[%s3 + $0x8] sm:$0xf]
      %v837 = vld [vmem:[%s3 + $0xc] sm:$0xf]
      %v838 = vld [vmem:[%s3 + $0x10] sm:$0xf]
      %v839 = vld [vmem:[%s3 + $0x14] sm:$0xf]
      %v840 = vld [vmem:[%s3 + $0x18] sm:$0xf]
      %v841 = vld [vmem:[%s3 + $0x1c] sm:$0xf]
      %v842 = vld [vmem:[%s3 + $0x20] sm:$0xf]
      %v843 = vld [vmem:[%s3 + $0x24] sm:$0xf]
      %v844 = vld [vmem:[%s3 + $0x28] sm:$0xf]
      %v845 = vld [vmem:[%s3 + $0x2c] sm:$0xf]
      %v846 = vld [vmem:[%s3 + $0x30] sm:$0xf]
      %v847 = vld [vmem:[%s3 + $0x34] sm:$0xf]
      %v848 = vld [vmem:[%s3 + $0x38] sm:$0xf]
      %v849 = vld [vmem:[%s3 + $0x3c] sm:$0xf]
      %v850 = vld [vmem:[#allocation3 + $0x8] sm:$0xf]
      %s851 = scalar_lea.vmem %s3, 64
      %v852 = vld [vmem:[%s851] sm:$0xf]
      %v853 = vld [vmem:[%s851 + $0x4] sm:$0xf]
      %v854 = vld [vmem:[%s851 + $0x8] sm:$0xf]
      %v855 = vld [vmem:[%s851 + $0xc] sm:$0xf]
      %v856 = vld [vmem:[%s851 + $0x10] sm:$0xf]
      %v857 = vld [vmem:[%s851 + $0x14] sm:$0xf]
      %v858 = vld [vmem:[%s851 + $0x18] sm:$0xf]
      %v859 = vld [vmem:[%s851 + $0x1c] sm:$0xf]
      %v860 = vld [vmem:[%s851 + $0x20] sm:$0xf]
      %v861 = vld [vmem:[%s851 + $0x24] sm:$0xf]
      %v862 = vld [vmem:[%s851 + $0x28] sm:$0xf]
      %v863 = vld [vmem:[%s851 + $0x2c] sm:$0xf]
      %v864 = vld [vmem:[%s851 + $0x30] sm:$0xf]
      %v865 = vld [vmem:[%s851 + $0x34] sm:$0xf]
      %v866 = vld [vmem:[%s851 + $0x38] sm:$0xf]
      %v867 = vld [vmem:[%s851 + $0x3c] sm:$0xf]
      %v871 = vunpack.c.l.b16 %v831
      %v872 = vunpack.c.l.b16 %v832
      %v873 = vunpack.c.l.b16 %v850
      %v874 = vpack.c.b16 %v872, %v871
      %v875 = vpack.c.b16 %v873, %v873
      %v877 = vshrl.u32 %v874, 16
      %v879 = vrot.slane %v877, 3
      %v880 = vshll.u32 %v874, 16
      %v882 = vrot.slane %v880, 4
      %v883 = vor.u32 %v879, %v882
      %v885 = vshrl.u32 %v875, 16
      %v887 = vrot.slane %v885, 3
      %v888 = vshll.u32 %v875, 16
      %v890 = vrot.slane %v888, 4
      %v891 = vor.u32 %v887, %v890
      %v892 = vsel %vm495, %v883, %v891
      %v910 = vunpack.c.l.b16 %v852
      %v911 = vunpack.c.l.b16 %v853
      %v912 = vunpack.c.l.b16 %v854
      %v913 = vunpack.c.l.b16 %v855
      %v914 = vunpack.c.l.b16 %v856
      %v915 = vunpack.c.l.b16 %v857
      %v916 = vunpack.c.l.b16 %v858
      %v917 = vunpack.c.l.b16 %v859
      %v918 = vunpack.c.l.b16 %v860
      %v919 = vunpack.c.l.b16 %v861
      %v920 = vunpack.c.l.b16 %v862
      %v921 = vunpack.c.l.b16 %v863
      %v922 = vunpack.c.l.b16 %v864
      %v923 = vunpack.c.l.b16 %v865
      %v924 = vunpack.c.l.b16 %v866
      %v925 = vunpack.c.l.b16 %v867
      %v926 = vpack.c.b16 %v911, %v910
      %v927 = vpack.c.b16 %v913, %v912
      %v928 = vpack.c.b16 %v915, %v914
      %v929 = vpack.c.b16 %v917, %v916
      %v930 = vpack.c.b16 %v919, %v918
      %v931 = vpack.c.b16 %v921, %v920
      %v932 = vpack.c.b16 %v923, %v922
      %v933 = vpack.c.b16 %v925, %v924
      %942 = vmatprep.subr.bf16.mxu0 0
      %943 = vmatpush1.bf16.msra.mxu0 %v933
      %944 = vmatprep.subr.bf16.mxu0 0
      %945 = vmatpush1.bf16.msra.mxu0 %v932
      %946 = vmatprep.subr.bf16.mxu0 0
      %947 = vmatpush1.bf16.msra.mxu0 %v931
      %948 = vmatprep.subr.bf16.mxu0 0
      %949 = vmatpush1.bf16.msra.mxu0 %v930
      %950 = vmatprep.subr.bf16.mxu0 0
      %951 = vmatpush1.bf16.msra.mxu0 %v929
      %952 = vmatprep.subr.bf16.mxu0 0
      %953 = vmatpush1.bf16.msra.mxu0 %v928
      %954 = vmatprep.subr.bf16.mxu0 0
      %955 = vmatpush1.bf16.msra.mxu0 %v927
      %956 = vmatprep.subr.bf16.mxu0 0
      %957 = vmatpush1.bf16.msra.mxu0 %v926
      %958 = vmatprep.subr.bf16.mxu0 0
      %959 = vmatpush2.bf16.msra.mxu0 0
      %960 = vmatprep.subr.bf16.mxu0 0
      %961 = vmatpush2.bf16.msra.mxu0 0
      %962 = vmatprep.subr.bf16.mxu0 0
      %963 = vmatpush2.bf16.msra.mxu0 0
      %964 = vmatprep.subr.bf16.mxu0 0
      %965 = vmatpush2.bf16.msra.mxu0 0
      %966 = vmatprep.subr.bf16.mxu0 0
      %967 = vmatpush2.bf16.msra.mxu0 0
      %968 = vmatprep.subr.bf16.mxu0 0
      %969 = vmatpush2.bf16.msra.mxu0 0
      %970 = vmatprep.subr.bf16.mxu0 0
      %971 = vmatpush2.bf16.msra.mxu0 0
      %972 = vmatprep.subr.bf16.mxu0 0
      %973 = vmatpush2.bf16.msra.mxu0 0
      %974 = vmatprep.mubr.bf16.mxu0 0
      %975 = vmatmul.mubr.bf16.gmra.mxu0 %v892
      %v976 = vpop.f32.mrf.mxu0
      %v977 = vadd.f32 0.0, %v976
      %v978 = vpop.f32.mrf.mxu0
      %v979 = vpop.f32.mrf.mxu0
      %v980 = vadd.f32 0.0, %v979
      %v981 = vpop.f32.mrf.mxu0
      %982 = vdwg.mxu0
      %v984 = vunpack.c.l.b16 %v833
      %v985 = vpack.c.b16 %v984, %v984
      %v986 = vrot.slane %v874, 3
      %v987 = vrot.slane %v985, 3
      %v988 = vsel %vm606, %v986, %v987
      %v1006 = vunpack.c.l.b16 %v834
      %v1007 = vunpack.c.l.b16 %v835
      %v1008 = vunpack.c.l.b16 %v836
      %v1009 = vunpack.c.l.b16 %v837
      %v1010 = vunpack.c.l.b16 %v838
      %v1011 = vunpack.c.l.b16 %v839
      %v1012 = vunpack.c.l.b16 %v840
      %v1013 = vunpack.c.l.b16 %v841
      %v1014 = vunpack.c.l.b16 %v842
      %v1015 = vunpack.c.l.b16 %v843
      %v1016 = vunpack.c.l.b16 %v844
      %v1017 = vunpack.c.l.b16 %v845
      %v1018 = vunpack.c.l.b16 %v846
      %v1019 = vunpack.c.l.b16 %v847
      %v1020 = vunpack.c.l.b16 %v848
      %v1021 = vunpack.c.l.b16 %v849
      %v1022 = vpack.c.b16 %v1007, %v1006
      %v1023 = vpack.c.b16 %v1009, %v1008
      %v1024 = vpack.c.b16 %v1011, %v1010
      %v1025 = vpack.c.b16 %v1013, %v1012
      %v1026 = vpack.c.b16 %v1015, %v1014
      %v1027 = vpack.c.b16 %v1017, %v1016
      %v1028 = vpack.c.b16 %v1019, %v1018
      %v1029 = vpack.c.b16 %v1021, %v1020
      %1038 = vmatprep.subr.bf16.mxu0 0
      %1039 = vmatpush1.bf16.msra.mxu0 %v1029
      %1040 = vmatprep.subr.bf16.mxu0 0
      %1041 = vmatpush1.bf16.msra.mxu0 %v1028
      %1042 = vmatprep.subr.bf16.mxu0 0
      %1043 = vmatpush1.bf16.msra.mxu0 %v1027
      %1044 = vmatprep.subr.bf16.mxu0 0
      %1045 = vmatpush1.bf16.msra.mxu0 %v1026
      %1046 = vmatprep.subr.bf16.mxu0 0
      %1047 = vmatpush1.bf16.msra.mxu0 %v1025
      %1048 = vmatprep.subr.bf16.mxu0 0
      %1049 = vmatpush1.bf16.msra.mxu0 %v1024
      %1050 = vmatprep.subr.bf16.mxu0 0
      %1051 = vmatpush1.bf16.msra.mxu0 %v1023
      %1052 = vmatprep.subr.bf16.mxu0 0
      %1053 = vmatpush1.bf16.msra.mxu0 %v1022
      %1054 = vmatprep.subr.bf16.mxu0 0
      %1055 = vmatpush2.bf16.msra.mxu0 0
      %1056 = vmatprep.subr.bf16.mxu0 0
      %1057 = vmatpush2.bf16.msra.mxu0 0
      %1058 = vmatprep.subr.bf16.mxu0 0
      %1059 = vmatpush2.bf16.msra.mxu0 0
      %1060 = vmatprep.subr.bf16.mxu0 0
      %1061 = vmatpush2.bf16.msra.mxu0 0
      %1062 = vmatprep.subr.bf16.mxu0 0
      %1063 = vmatpush2.bf16.msra.mxu0 0
      %1064 = vmatprep.subr.bf16.mxu0 0
      %1065 = vmatpush2.bf16.msra.mxu0 0
      %1066 = vmatprep.subr.bf16.mxu0 0
      %1067 = vmatpush2.bf16.msra.mxu0 0
      %1068 = vmatprep.subr.bf16.mxu0 0
      %1069 = vmatpush2.bf16.msra.mxu0 0
      %1070 = vmatprep.mubr.bf16.mxu0 0
      %1071 = vmatmul.mubr.bf16.gmra.mxu0 %v988
      %v1072 = vpop.f32.mrf.mxu0
      %v1073 = vadd.f32 %v977, %v1072
      %v1074 = vpop.f32.mrf.mxu0
      %v1075 = vpop.f32.mrf.mxu0
      %v1076 = vadd.f32 %v980, %v1075
      %v1077 = vpop.f32.mrf.mxu0
      %1078 = vdwg.mxu0
      %s1079 = scalar_lea.vmem %s3, 128
      %v1080 = vld [vmem:[%s1079] sm:$0xf]
      %v1081 = vld [vmem:[%s1079 + $0x4] sm:$0xf]
      %v1082 = vld [vmem:[%s1079 + $0x8] sm:$0xf]
      %v1083 = vld [vmem:[%s1079 + $0xc] sm:$0xf]
      %v1084 = vld [vmem:[%s1079 + $0x10] sm:$0xf]
      %v1085 = vld [vmem:[%s1079 + $0x14] sm:$0xf]
      %v1086 = vld [vmem:[%s1079 + $0x18] sm:$0xf]
      %v1087 = vld [vmem:[%s1079 + $0x1c] sm:$0xf]
      %v1088 = vld [vmem:[%s1079 + $0x20] sm:$0xf]
      %v1089 = vld [vmem:[%s1079 + $0x24] sm:$0xf]
      %v1090 = vld [vmem:[%s1079 + $0x28] sm:$0xf]
      %v1091 = vld [vmem:[%s1079 + $0x2c] sm:$0xf]
      %v1092 = vld [vmem:[%s1079 + $0x30] sm:$0xf]
      %v1093 = vld [vmem:[%s1079 + $0x34] sm:$0xf]
      %v1094 = vld [vmem:[%s1079 + $0x38] sm:$0xf]
      %v1095 = vld [vmem:[%s1079 + $0x3c] sm:$0xf]
      %v1096 = vpack.c.b16 %v873, %v872
      %v1114 = vunpack.c.l.b16 %v1080
      %v1115 = vunpack.c.l.b16 %v1081
      %v1116 = vunpack.c.l.b16 %v1082
      %v1117 = vunpack.c.l.b16 %v1083
      %v1118 = vunpack.c.l.b16 %v1084
      %v1119 = vunpack.c.l.b16 %v1085
      %v1120 = vunpack.c.l.b16 %v1086
      %v1121 = vunpack.c.l.b16 %v1087
      %v1122 = vunpack.c.l.b16 %v1088
      %v1123 = vunpack.c.l.b16 %v1089
      %v1124 = vunpack.c.l.b16 %v1090
      %v1125 = vunpack.c.l.b16 %v1091
      %v1126 = vunpack.c.l.b16 %v1092
      %v1127 = vunpack.c.l.b16 %v1093
      %v1128 = vunpack.c.l.b16 %v1094
      %v1129 = vunpack.c.l.b16 %v1095
      %v1130 = vpack.c.b16 %v1115, %v1114
      %v1131 = vpack.c.b16 %v1117, %v1116
      %v1132 = vpack.c.b16 %v1119, %v1118
      %v1133 = vpack.c.b16 %v1121, %v1120
      %v1134 = vpack.c.b16 %v1123, %v1122
      %v1135 = vpack.c.b16 %v1125, %v1124
      %v1136 = vpack.c.b16 %v1127, %v1126
      %v1137 = vpack.c.b16 %v1129, %v1128
      %1146 = vmatprep.subr.bf16.mxu0 0
      %1147 = vmatpush1.bf16.msra.mxu0 %v1137
      %1148 = vmatprep.subr.bf16.mxu0 0
      %1149 = vmatpush1.bf16.msra.mxu0 %v1136
      %1150 = vmatprep.subr.bf16.mxu0 0
      %1151 = vmatpush1.bf16.msra.mxu0 %v1135
      %1152 = vmatprep.subr.bf16.mxu0 0
      %1153 = vmatpush1.bf16.msra.mxu0 %v1134
      %1154 = vmatprep.subr.bf16.mxu0 0
      %1155 = vmatpush1.bf16.msra.mxu0 %v1133
      %1156 = vmatprep.subr.bf16.mxu0 0
      %1157 = vmatpush1.bf16.msra.mxu0 %v1132
      %1158 = vmatprep.subr.bf16.mxu0 0
      %1159 = vmatpush1.bf16.msra.mxu0 %v1131
      %1160 = vmatprep.subr.bf16.mxu0 0
      %1161 = vmatpush1.bf16.msra.mxu0 %v1130
      %1162 = vmatprep.subr.bf16.mxu0 0
      %1163 = vmatpush2.bf16.msra.mxu0 0
      %1164 = vmatprep.subr.bf16.mxu0 0
      %1165 = vmatpush2.bf16.msra.mxu0 0
      %1166 = vmatprep.subr.bf16.mxu0 0
      %1167 = vmatpush2.bf16.msra.mxu0 0
      %1168 = vmatprep.subr.bf16.mxu0 0
      %1169 = vmatpush2.bf16.msra.mxu0 0
      %1170 = vmatprep.subr.bf16.mxu0 0
      %1171 = vmatpush2.bf16.msra.mxu0 0
      %1172 = vmatprep.subr.bf16.mxu0 0
      %1173 = vmatpush2.bf16.msra.mxu0 0
      %1174 = vmatprep.subr.bf16.mxu0 0
      %1175 = vmatpush2.bf16.msra.mxu0 0
      %1176 = vmatprep.subr.bf16.mxu0 0
      %1177 = vmatpush2.bf16.msra.mxu0 0
      %1178 = vmatprep.mubr.bf16.mxu0 0
      %1179 = vmatmul.mubr.bf16.gmra.mxu0 %v1096
      %v1180 = vpop.f32.mrf.mxu0
      %v1181 = vadd.f32 0.0, %v1180
      %v1182 = vpop.f32.mrf.mxu0
      %v1183 = vpop.f32.mrf.mxu0
      %v1184 = vadd.f32 0.0, %v1183
      %v1185 = vpop.f32.mrf.mxu0
      %1186 = vdwg.mxu0
      %v1187 = vadd.f32 %v1073, %v1181
      %v1188 = vadd.f32 %v1076, %v1184
      %v1189 = vld [vmem:[%s4] sm:$0x1]
      %v1190 = vunpack.c.l.bf16 %v1189
      %v1191 = vlaneseq
      %v1192 = vshrl.u32 %v1191, 7
      %v1193 = vsub.s32 0, %v1192
      %v1194 = vrot.slane %v1190, %v1193
      %v1195 = vadd.f32 %v1187, %v1194
      %v1196 = vadd.f32 %v1188, %v1194
      %v1197 = vmax.f32 %v1195, 0.0
      %v1198 = vmax.f32 %v1196, 0.0
      %v1199 = vld [vmem:[#allocation2 + $0x4] sm:$0xf]
      %v1200 = vld [vmem:[#allocation2 + $0x8] sm:$0xf]
      %v1201 = vld [vmem:[%s5] sm:$0xf]
      %v1202 = vld [vmem:[%s5 + $0x4] sm:$0xf]
      %v1203 = vld [vmem:[%s5 + $0x8] sm:$0xf]
      %v1204 = vld [vmem:[%s5 + $0xc] sm:$0xf]
      %v1205 = vld [vmem:[%s5 + $0x10] sm:$0xf]
      %v1206 = vld [vmem:[%s5 + $0x14] sm:$0xf]
      %v1207 = vld [vmem:[%s5 + $0x18] sm:$0xf]
      %v1208 = vld [vmem:[%s5 + $0x1c] sm:$0xf]
      %v1209 = vld [vmem:[%s5 + $0x20] sm:$0xf]
      %v1210 = vld [vmem:[%s5 + $0x24] sm:$0xf]
      %v1211 = vld [vmem:[%s5 + $0x28] sm:$0xf]
      %v1212 = vld [vmem:[%s5 + $0x2c] sm:$0xf]
      %v1213 = vld [vmem:[%s5 + $0x30] sm:$0xf]
      %v1214 = vld [vmem:[%s5 + $0x34] sm:$0xf]
      %v1215 = vld [vmem:[%s5 + $0x38] sm:$0xf]
      %v1216 = vld [vmem:[%s5 + $0x3c] sm:$0xf]
      %v1217 = vld [vmem:[%s6] sm:$0x1]
      %v1218 = vunpack.c.l.bf16 %v1217
      %v1219 = vlaneseq
      %v1220 = vshrl.u32 %v1219, 7
      %v1221 = vsub.s32 0, %v1220
      %v1222 = vrot.slane %v1218, %v1221
      %v1225 = vunpack.c.l.b16 %v1199
      %v1226 = vunpack.c.l.b16 %v1200
      %v1227 = vpack.c.b16 %v1226, %v1225
      %v1245 = vunpack.c.l.b16 %v1201
      %v1246 = vunpack.c.l.b16 %v1202
      %v1247 = vunpack.c.l.b16 %v1203
      %v1248 = vunpack.c.l.b16 %v1204
      %v1249 = vunpack.c.l.b16 %v1205
      %v1250 = vunpack.c.l.b16 %v1206
      %v1251 = vunpack.c.l.b16 %v1207
      %v1252 = vunpack.c.l.b16 %v1208
      %v1253 = vunpack.c.l.b16 %v1209
      %v1254 = vunpack.c.l.b16 %v1210
      %v1255 = vunpack.c.l.b16 %v1211
      %v1256 = vunpack.c.l.b16 %v1212
      %v1257 = vunpack.c.l.b16 %v1213
      %v1258 = vunpack.c.l.b16 %v1214
      %v1259 = vunpack.c.l.b16 %v1215
      %v1260 = vunpack.c.l.b16 %v1216
      %v1261 = vpack.c.b16 %v1246, %v1245
      %v1262 = vpack.c.b16 %v1248, %v1247
      %v1263 = vpack.c.b16 %v1250, %v1249
      %v1264 = vpack.c.b16 %v1252, %v1251
      %v1265 = vpack.c.b16 %v1254, %v1253
      %v1266 = vpack.c.b16 %v1256, %v1255
      %v1267 = vpack.c.b16 %v1258, %v1257
      %v1268 = vpack.c.b16 %v1260, %v1259
      %1277 = vmatprep.subr.bf16.mxu0 0
      %1278 = vmatpush1.bf16.msra.mxu0 %v1268
      %1279 = vmatprep.subr.bf16.mxu0 0
      %1280 = vmatpush1.bf16.msra.mxu0 %v1267
      %1281 = vmatprep.subr.bf16.mxu0 0
      %1282 = vmatpush1.bf16.msra.mxu0 %v1266
      %1283 = vmatprep.subr.bf16.mxu0 0
      %1284 = vmatpush1.bf16.msra.mxu0 %v1265
      %1285 = vmatprep.subr.bf16.mxu0 0
      %1286 = vmatpush1.bf16.msra.mxu0 %v1264
      %1287 = vmatprep.subr.bf16.mxu0 0
      %1288 = vmatpush1.bf16.msra.mxu0 %v1263
      %1289 = vmatprep.subr.bf16.mxu0 0
      %1290 = vmatpush1.bf16.msra.mxu0 %v1262
      %1291 = vmatprep.subr.bf16.mxu0 0
      %1292 = vmatpush1.bf16.msra.mxu0 %v1261
      %1293 = vmatprep.subr.bf16.mxu0 0
      %1294 = vmatpush2.bf16.msra.mxu0 0
      %1295 = vmatprep.subr.bf16.mxu0 0
      %1296 = vmatpush2.bf16.msra.mxu0 0
      %1297 = vmatprep.subr.bf16.mxu0 0
      %1298 = vmatpush2.bf16.msra.mxu0 0
      %1299 = vmatprep.subr.bf16.mxu0 0
      %1300 = vmatpush2.bf16.msra.mxu0 0
      %1301 = vmatprep.subr.bf16.mxu0 0
      %1302 = vmatpush2.bf16.msra.mxu0 0
      %1303 = vmatprep.subr.bf16.mxu0 0
      %1304 = vmatpush2.bf16.msra.mxu0 0
      %1305 = vmatprep.subr.bf16.mxu0 0
      %1306 = vmatpush2.bf16.msra.mxu0 0
      %1307 = vmatprep.subr.bf16.mxu0 0
      %1308 = vmatpush2.bf16.msra.mxu0 0
      %1309 = vmatprep.mubr.bf16.mxu0 0
      %1310 = vmatmul.mubr.bf16.gmra.mxu0 %v1227
      %v1311 = vpop.f32.mrf.mxu0
      %v1312 = vadd.f32 %v1222, %v1311
      %v1313 = vpop.f32.mrf.mxu0
      %v1314 = vpop.f32.mrf.mxu0
      %v1315 = vadd.f32 %v1222, %v1314
      %v1316 = vpop.f32.mrf.mxu0
      %1317 = vdwg.mxu0
      %v1318 = vadd.f32 %v1197, %v1312
      %v1319 = vadd.f32 %v1198, %v1315
      %v1320 = vmax.f32 %v1318, 0.0
      %v1321 = vmax.f32 %v1319, 0.0
      %v1322 = vpack.c.bf16 %v1321, %v1320
      %v1324 = vunpack.c.l.b16 %v1322
      %v1325 = vunpack.c.h.b16 %v1322
      %v1326 = vpack.c.b16 %v1324, %v1324
      %v1327 = vpack.c.b16 %v1325, %v1325
      %1330 = vst [vmem:[#allocation2 + $0x4] sm:$0xf] %v1326
      %1331 = vst [vmem:[#allocation2 + $0x8] sm:$0xf] %v1327
      %v1332 = vld [vmem:[#allocation2] sm:$0xc]
      %v1333 = vld [vmem:[#allocation2 + $0x4] sm:$0xf]
      %v1334 = vld [vmem:[#allocation2 + $0x8] sm:$0x3]
      %v1335 = vld [vmem:[%s7] sm:$0xf]
      %v1336 = vld [vmem:[%s7 + $0x4] sm:$0xf]
      %v1337 = vld [vmem:[%s7 + $0x8] sm:$0xf]
      %v1338 = vld [vmem:[%s7 + $0xc] sm:$0xf]
      %v1339 = vld [vmem:[%s7 + $0x10] sm:$0xf]
      %v1340 = vld [vmem:[%s7 + $0x14] sm:$0xf]
      %v1341 = vld [vmem:[%s7 + $0x18] sm:$0xf]
      %v1342 = vld [vmem:[%s7 + $0x1c] sm:$0xf]
      %v1343 = vld [vmem:[%s7 + $0x20] sm:$0xf]
      %v1344 = vld [vmem:[%s7 + $0x24] sm:$0xf]
      %v1345 = vld [vmem:[%s7 + $0x28] sm:$0xf]
      %v1346 = vld [vmem:[%s7 + $0x2c] sm:$0xf]
      %v1347 = vld [vmem:[%s7 + $0x30] sm:$0xf]
      %v1348 = vld [vmem:[%s7 + $0x34] sm:$0xf]
      %v1349 = vld [vmem:[%s7 + $0x38] sm:$0xf]
      %v1350 = vld [vmem:[%s7 + $0x3c] sm:$0xf]
      %v1351 = vld [vmem:[#allocation2] sm:$0x8]
      %v1352 = vld [vmem:[#allocation2 + $0x8] sm:$0x7]
      %s1353 = scalar_lea.vmem %s7, 64
      %v1354 = vld [vmem:[%s1353] sm:$0xf]
      %v1355 = vld [vmem:[%s1353 + $0x4] sm:$0xf]
      %v1356 = vld [vmem:[%s1353 + $0x8] sm:$0xf]
      %v1357 = vld [vmem:[%s1353 + $0xc] sm:$0xf]
      %v1358 = vld [vmem:[%s1353 + $0x10] sm:$0xf]
      %v1359 = vld [vmem:[%s1353 + $0x14] sm:$0xf]
      %v1360 = vld [vmem:[%s1353 + $0x18] sm:$0xf]
      %v1361 = vld [vmem:[%s1353 + $0x1c] sm:$0xf]
      %v1362 = vld [vmem:[%s1353 + $0x20] sm:$0xf]
      %v1363 = vld [vmem:[%s1353 + $0x24] sm:$0xf]
      %v1364 = vld [vmem:[%s1353 + $0x28] sm:$0xf]
      %v1365 = vld [vmem:[%s1353 + $0x2c] sm:$0xf]
      %v1366 = vld [vmem:[%s1353 + $0x30] sm:$0xf]
      %v1367 = vld [vmem:[%s1353 + $0x34] sm:$0xf]
      %v1368 = vld [vmem:[%s1353 + $0x38] sm:$0xf]
      %v1369 = vld [vmem:[%s1353 + $0x3c] sm:$0xf]
      %v1373 = vunpack.c.l.b16 %v1351
      %v1374 = vunpack.c.l.b16 %v1333
      %v1375 = vunpack.c.l.b16 %v1352
      %v1376 = vpack.c.b16 %v1374, %v1373
      %v1377 = vpack.c.b16 %v1375, %v1375
      %v1378 = vrot.slane %v1376, 3
      %v1379 = vrot.slane %v1377, 3
      %v1380 = vsel %vm606, %v1378, %v1379
      %v1398 = vunpack.c.l.b16 %v1354
      %v1399 = vunpack.c.l.b16 %v1355
      %v1400 = vunpack.c.l.b16 %v1356
      %v1401 = vunpack.c.l.b16 %v1357
      %v1402 = vunpack.c.l.b16 %v1358
      %v1403 = vunpack.c.l.b16 %v1359
      %v1404 = vunpack.c.l.b16 %v1360
      %v1405 = vunpack.c.l.b16 %v1361
      %v1406 = vunpack.c.l.b16 %v1362
      %v1407 = vunpack.c.l.b16 %v1363
      %v1408 = vunpack.c.l.b16 %v1364
      %v1409 = vunpack.c.l.b16 %v1365
      %v1410 = vunpack.c.l.b16 %v1366
      %v1411 = vunpack.c.l.b16 %v1367
      %v1412 = vunpack.c.l.b16 %v1368
      %v1413 = vunpack.c.l.b16 %v1369
      %v1414 = vpack.c.b16 %v1399, %v1398
      %v1415 = vpack.c.b16 %v1401, %v1400
      %v1416 = vpack.c.b16 %v1403, %v1402
      %v1417 = vpack.c.b16 %v1405, %v1404
      %v1418 = vpack.c.b16 %v1407, %v1406
      %v1419 = vpack.c.b16 %v1409, %v1408
      %v1420 = vpack.c.b16 %v1411, %v1410
      %v1421 = vpack.c.b16 %v1413, %v1412
      %1430 = vmatprep.subr.bf16.mxu0 0
      %1431 = vmatpush1.bf16.msra.mxu0 %v1421
      %1432 = vmatprep.subr.bf16.mxu0 0
      %1433 = vmatpush1.bf16.msra.mxu0 %v1420
      %1434 = vmatprep.subr.bf16.mxu0 0
      %1435 = vmatpush1.bf16.msra.mxu0 %v1419
      %1436 = vmatprep.subr.bf16.mxu0 0
      %1437 = vmatpush1.bf16.msra.mxu0 %v1418
      %1438 = vmatprep.subr.bf16.mxu0 0
      %1439 = vmatpush1.bf16.msra.mxu0 %v1417
      %1440 = vmatprep.subr.bf16.mxu0 0
      %1441 = vmatpush1.bf16.msra.mxu0 %v1416
      %1442 = vmatprep.subr.bf16.mxu0 0
      %1443 = vmatpush1.bf16.msra.mxu0 %v1415
      %1444 = vmatprep.subr.bf16.mxu0 0
      %1445 = vmatpush1.bf16.msra.mxu0 %v1414
      %1446 = vmatprep.subr.bf16.mxu0 0
      %1447 = vmatpush2.bf16.msra.mxu0 0
      %1448 = vmatprep.subr.bf16.mxu0 0
      %1449 = vmatpush2.bf16.msra.mxu0 0
      %1450 = vmatprep.subr.bf16.mxu0 0
      %1451 = vmatpush2.bf16.msra.mxu0 0
      %1452 = vmatprep.subr.bf16.mxu0 0
      %1453 = vmatpush2.bf16.msra.mxu0 0
      %1454 = vmatprep.subr.bf16.mxu0 0
      %1455 = vmatpush2.bf16.msra.mxu0 0
      %1456 = vmatprep.subr.bf16.mxu0 0
      %1457 = vmatpush2.bf16.msra.mxu0 0
      %1458 = vmatprep.subr.bf16.mxu0 0
      %1459 = vmatpush2.bf16.msra.mxu0 0
      %1460 = vmatprep.subr.bf16.mxu0 0
      %1461 = vmatpush2.bf16.msra.mxu0 0
      %1462 = vmatprep.mubr.bf16.mxu0 0
      %1463 = vmatmul.mubr.bf16.gmra.mxu0 %v1380
      %v1464 = vpop.f32.mrf.mxu0
      %v1465 = vadd.f32 0.0, %v1464
      %v1466 = vpop.f32.mrf.mxu0
      %v1467 = vpop.f32.mrf.mxu0
      %v1468 = vadd.f32 0.0, %v1467
      %v1469 = vpop.f32.mrf.mxu0
      %1470 = vdwg.mxu0
      %v1473 = vunpack.c.l.b16 %v1332
      %v1474 = vunpack.c.l.b16 %v1334
      %v1475 = vpack.c.b16 %v1374, %v1473
      %v1476 = vpack.c.b16 %v1474, %v1474
      %vm1477 = vcmask 1045504
      %v1478 = vrot.slane %v1475, 2
      %v1479 = vrot.slane %v1476, 2
      %v1480 = vsel %vm1477, %v1478, %v1479
      %v1498 = vunpack.c.l.b16 %v1335
      %v1499 = vunpack.c.l.b16 %v1336
      %v1500 = vunpack.c.l.b16 %v1337
      %v1501 = vunpack.c.l.b16 %v1338
      %v1502 = vunpack.c.l.b16 %v1339
      %v1503 = vunpack.c.l.b16 %v1340
      %v1504 = vunpack.c.l.b16 %v1341
      %v1505 = vunpack.c.l.b16 %v1342
      %v1506 = vunpack.c.l.b16 %v1343
      %v1507 = vunpack.c.l.b16 %v1344
      %v1508 = vunpack.c.l.b16 %v1345
      %v1509 = vunpack.c.l.b16 %v1346
      %v1510 = vunpack.c.l.b16 %v1347
      %v1511 = vunpack.c.l.b16 %v1348
      %v1512 = vunpack.c.l.b16 %v1349
      %v1513 = vunpack.c.l.b16 %v1350
      %v1514 = vpack.c.b16 %v1499, %v1498
      %v1515 = vpack.c.b16 %v1501, %v1500
      %v1516 = vpack.c.b16 %v1503, %v1502
      %v1517 = vpack.c.b16 %v1505, %v1504
      %v1518 = vpack.c.b16 %v1507, %v1506
      %v1519 = vpack.c.b16 %v1509, %v1508
      %v1520 = vpack.c.b16 %v1511, %v1510
      %v1521 = vpack.c.b16 %v1513, %v1512
      %1530 = vmatprep.subr.bf16.mxu0 0
      %1531 = vmatpush1.bf16.msra.mxu0 %v1521
      %1532 = vmatprep.subr.bf16.mxu0 0
      %1533 = vmatpush1.bf16.msra.mxu0 %v1520
      %1534 = vmatprep.subr.bf16.mxu0 0
      %1535 = vmatpush1.bf16.msra.mxu0 %v1519
      %1536 = vmatprep.subr.bf16.mxu0 0
      %1537 = vmatpush1.bf16.msra.mxu0 %v1518
      %1538 = vmatprep.subr.bf16.mxu0 0
      %1539 = vmatpush1.bf16.msra.mxu0 %v1517
      %1540 = vmatprep.subr.bf16.mxu0 0
      %1541 = vmatpush1.bf16.msra.mxu0 %v1516
      %1542 = vmatprep.subr.bf16.mxu0 0
      %1543 = vmatpush1.bf16.msra.mxu0 %v1515
      %1544 = vmatprep.subr.bf16.mxu0 0
      %1545 = vmatpush1.bf16.msra.mxu0 %v1514
      %1546 = vmatprep.subr.bf16.mxu0 0
      %1547 = vmatpush2.bf16.msra.mxu0 0
      %1548 = vmatprep.subr.bf16.mxu0 0
      %1549 = vmatpush2.bf16.msra.mxu0 0
      %1550 = vmatprep.subr.bf16.mxu0 0
      %1551 = vmatpush2.bf16.msra.mxu0 0
      %1552 = vmatprep.subr.bf16.mxu0 0
      %1553 = vmatpush2.bf16.msra.mxu0 0
      %1554 = vmatprep.subr.bf16.mxu0 0
      %1555 = vmatpush2.bf16.msra.mxu0 0
      %1556 = vmatprep.subr.bf16.mxu0 0
      %1557 = vmatpush2.bf16.msra.mxu0 0
      %1558 = vmatprep.subr.bf16.mxu0 0
      %1559 = vmatpush2.bf16.msra.mxu0 0
      %1560 = vmatprep.subr.bf16.mxu0 0
      %1561 = vmatpush2.bf16.msra.mxu0 0
      %1562 = vmatprep.mubr.bf16.mxu0 0
      %1563 = vmatmul.mubr.bf16.gmra.mxu0 %v1480
      %v1564 = vpop.f32.mrf.mxu0
      %v1565 = vadd.f32 %v1465, %v1564
      %v1566 = vpop.f32.mrf.mxu0
      %v1567 = vpop.f32.mrf.mxu0
      %v1568 = vadd.f32 %v1468, %v1567
      %v1569 = vpop.f32.mrf.mxu0
      %1570 = vdwg.mxu0
      %v1571 = vld [vmem:[#allocation2 + $0x8] sm:$0xf]
      %s1572 = scalar_lea.vmem %s7, 128
      %v1573 = vld [vmem:[%s1572] sm:$0xf]
      %v1574 = vld [vmem:[%s1572 + $0x4] sm:$0xf]
      %v1575 = vld [vmem:[%s1572 + $0x8] sm:$0xf]
      %v1576 = vld [vmem:[%s1572 + $0xc] sm:$0xf]
      %v1577 = vld [vmem:[%s1572 + $0x10] sm:$0xf]
      %v1578 = vld [vmem:[%s1572 + $0x14] sm:$0xf]
      %v1579 = vld [vmem:[%s1572 + $0x18] sm:$0xf]
      %v1580 = vld [vmem:[%s1572 + $0x1c] sm:$0xf]
      %v1581 = vld [vmem:[%s1572 + $0x20] sm:$0xf]
      %v1582 = vld [vmem:[%s1572 + $0x24] sm:$0xf]
      %v1583 = vld [vmem:[%s1572 + $0x28] sm:$0xf]
      %v1584 = vld [vmem:[%s1572 + $0x2c] sm:$0xf]
      %v1585 = vld [vmem:[%s1572 + $0x30] sm:$0xf]
      %v1586 = vld [vmem:[%s1572 + $0x34] sm:$0xf]
      %v1587 = vld [vmem:[%s1572 + $0x38] sm:$0xf]
      %v1588 = vld [vmem:[%s1572 + $0x3c] sm:$0xf]
      %v1590 = vunpack.c.l.b16 %v1571
      %v1591 = vpack.c.b16 %v1590, %v1374
      %v1609 = vunpack.c.l.b16 %v1573
      %v1610 = vunpack.c.l.b16 %v1574
      %v1611 = vunpack.c.l.b16 %v1575
      %v1612 = vunpack.c.l.b16 %v1576
      %v1613 = vunpack.c.l.b16 %v1577
      %v1614 = vunpack.c.l.b16 %v1578
      %v1615 = vunpack.c.l.b16 %v1579
      %v1616 = vunpack.c.l.b16 %v1580
      %v1617 = vunpack.c.l.b16 %v1581
      %v1618 = vunpack.c.l.b16 %v1582
      %v1619 = vunpack.c.l.b16 %v1583
      %v1620 = vunpack.c.l.b16 %v1584
      %v1621 = vunpack.c.l.b16 %v1585
      %v1622 = vunpack.c.l.b16 %v1586
      %v1623 = vunpack.c.l.b16 %v1587
      %v1624 = vunpack.c.l.b16 %v1588
      %v1625 = vpack.c.b16 %v1610, %v1609
      %v1626 = vpack.c.b16 %v1612, %v1611
      %v1627 = vpack.c.b16 %v1614, %v1613
      %v1628 = vpack.c.b16 %v1616, %v1615
      %v1629 = vpack.c.b16 %v1618, %v1617
      %v1630 = vpack.c.b16 %v1620, %v1619
      %v1631 = vpack.c.b16 %v1622, %v1621
      %v1632 = vpack.c.b16 %v1624, %v1623
      %1641 = vmatprep.subr.bf16.mxu0 0
      %1642 = vmatpush1.bf16.msra.mxu0 %v1632
      %1643 = vmatprep.subr.bf16.mxu0 0
      %1644 = vmatpush1.bf16.msra.mxu0 %v1631
      %1645 = vmatprep.subr.bf16.mxu0 0
      %1646 = vmatpush1.bf16.msra.mxu0 %v1630
      %1647 = vmatprep.subr.bf16.mxu0 0
      %1648 = vmatpush1.bf16.msra.mxu0 %v1629
      %1649 = vmatprep.subr.bf16.mxu0 0
      %1650 = vmatpush1.bf16.msra.mxu0 %v1628
      %1651 = vmatprep.subr.bf16.mxu0 0
      %1652 = vmatpush1.bf16.msra.mxu0 %v1627
      %1653 = vmatprep.subr.bf16.mxu0 0
      %1654 = vmatpush1.bf16.msra.mxu0 %v1626
      %1655 = vmatprep.subr.bf16.mxu0 0
      %1656 = vmatpush1.bf16.msra.mxu0 %v1625
      %1657 = vmatprep.subr.bf16.mxu0 0
      %1658 = vmatpush2.bf16.msra.mxu0 0
      %1659 = vmatprep.subr.bf16.mxu0 0
      %1660 = vmatpush2.bf16.msra.mxu0 0
      %1661 = vmatprep.subr.bf16.mxu0 0
      %1662 = vmatpush2.bf16.msra.mxu0 0
      %1663 = vmatprep.subr.bf16.mxu0 0
      %1664 = vmatpush2.bf16.msra.mxu0 0
      %1665 = vmatprep.subr.bf16.mxu0 0
      %1666 = vmatpush2.bf16.msra.mxu0 0
      %1667 = vmatprep.subr.bf16.mxu0 0
      %1668 = vmatpush2.bf16.msra.mxu0 0
      %1669 = vmatprep.subr.bf16.mxu0 0
      %1670 = vmatpush2.bf16.msra.mxu0 0
      %1671 = vmatprep.subr.bf16.mxu0 0
      %1672 = vmatpush2.bf16.msra.mxu0 0
      %1673 = vmatprep.mubr.bf16.mxu0 0
      %1674 = vmatmul.mubr.bf16.gmra.mxu0 %v1591
      %v1675 = vpop.f32.mrf.mxu0
      %v1676 = vadd.f32 0.0, %v1675
      %v1677 = vpop.f32.mrf.mxu0
      %v1678 = vpop.f32.mrf.mxu0
      %v1679 = vadd.f32 0.0, %v1678
      %v1680 = vpop.f32.mrf.mxu0
      %1681 = vdwg.mxu0
      %v1682 = vadd.f32 %v1565, %v1676
      %v1683 = vadd.f32 %v1568, %v1679
      %v1684 = vld [vmem:[%s8] sm:$0x1]
      %v1685 = vunpack.c.l.bf16 %v1684
      %v1686 = vlaneseq
      %v1687 = vshrl.u32 %v1686, 7
      %v1688 = vsub.s32 0, %v1687
      %v1689 = vrot.slane %v1685, %v1688
      %v1690 = vadd.f32 %v1682, %v1689
      %v1691 = vadd.f32 %v1683, %v1689
      %v1692 = vmax.f32 %v1690, 0.0
      %v1693 = vmax.f32 %v1691, 0.0
      %v1694 = vpack.c.bf16 %v1693, %v1692
      %v1696 = vunpack.c.l.b16 %v1694
      %v1697 = vunpack.c.h.b16 %v1694
      %v1698 = vpack.c.b16 %v1696, %v1696
      %v1699 = vpack.c.b16 %v1697, %v1697
      %1702 = vst [vmem:[#allocation3 + $0x4] sm:$0xf] %v1698
      %1703 = vst [vmem:[#allocation3 + $0x8] sm:$0xf] %v1699
      %1704 = vst [vmem:[#allocation3] sm:$0xf] 0
      %v1705 = vld [vmem:[#allocation3] sm:$0xc]
      %v1706 = vld [vmem:[#allocation3 + $0x4] sm:$0xf]
      %v1707 = vld [vmem:[#allocation3 + $0x8] sm:$0x3]
      %v1708 = vld [vmem:[%s9] sm:$0xf]
      %v1709 = vld [vmem:[%s9 + $0x4] sm:$0xf]
      %v1710 = vld [vmem:[%s9 + $0x8] sm:$0xf]
      %v1711 = vld [vmem:[%s9 + $0xc] sm:$0xf]
      %v1712 = vld [vmem:[%s9 + $0x10] sm:$0xf]
      %v1713 = vld [vmem:[%s9 + $0x14] sm:$0xf]
      %v1714 = vld [vmem:[%s9 + $0x18] sm:$0xf]
      %v1715 = vld [vmem:[%s9 + $0x1c] sm:$0xf]
      %v1716 = vld [vmem:[%s9 + $0x20] sm:$0xf]
      %v1717 = vld [vmem:[%s9 + $0x24] sm:$0xf]
      %v1718 = vld [vmem:[%s9 + $0x28] sm:$0xf]
      %v1719 = vld [vmem:[%s9 + $0x2c] sm:$0xf]
      %v1720 = vld [vmem:[%s9 + $0x30] sm:$0xf]
      %v1721 = vld [vmem:[%s9 + $0x34] sm:$0xf]
      %v1722 = vld [vmem:[%s9 + $0x38] sm:$0xf]
      %v1723 = vld [vmem:[%s9 + $0x3c] sm:$0xf]
      %v1724 = vld [vmem:[#allocation3] sm:$0x8]
      %v1725 = vld [vmem:[#allocation3 + $0x8] sm:$0x7]
      %s1726 = scalar_lea.vmem %s9, 64
      %v1727 = vld [vmem:[%s1726] sm:$0xf]
      %v1728 = vld [vmem:[%s1726 + $0x4] sm:$0xf]
      %v1729 = vld [vmem:[%s1726 + $0x8] sm:$0xf]
      %v1730 = vld [vmem:[%s1726 + $0xc] sm:$0xf]
      %v1731 = vld [vmem:[%s1726 + $0x10] sm:$0xf]
      %v1732 = vld [vmem:[%s1726 + $0x14] sm:$0xf]
      %v1733 = vld [vmem:[%s1726 + $0x18] sm:$0xf]
      %v1734 = vld [vmem:[%s1726 + $0x1c] sm:$0xf]
      %v1735 = vld [vmem:[%s1726 + $0x20] sm:$0xf]
      %v1736 = vld [vmem:[%s1726 + $0x24] sm:$0xf]
      %v1737 = vld [vmem:[%s1726 + $0x28] sm:$0xf]
      %v1738 = vld [vmem:[%s1726 + $0x2c] sm:$0xf]
      %v1739 = vld [vmem:[%s1726 + $0x30] sm:$0xf]
      %v1740 = vld [vmem:[%s1726 + $0x34] sm:$0xf]
      %v1741 = vld [vmem:[%s1726 + $0x38] sm:$0xf]
      %v1742 = vld [vmem:[%s1726 + $0x3c] sm:$0xf]
      %v1746 = vunpack.c.l.b16 %v1724
      %v1747 = vunpack.c.l.b16 %v1706
      %v1748 = vunpack.c.l.b16 %v1725
      %v1749 = vpack.c.b16 %v1747, %v1746
      %v1750 = vpack.c.b16 %v1748, %v1748
      %v1751 = vrot.slane %v1749, 3
      %v1752 = vrot.slane %v1750, 3
      %v1753 = vsel %vm606, %v1751, %v1752
      %v1771 = vunpack.c.l.b16 %v1727
      %v1772 = vunpack.c.l.b16 %v1728
      %v1773 = vunpack.c.l.b16 %v1729
      %v1774 = vunpack.c.l.b16 %v1730
      %v1775 = vunpack.c.l.b16 %v1731
      %v1776 = vunpack.c.l.b16 %v1732
      %v1777 = vunpack.c.l.b16 %v1733
      %v1778 = vunpack.c.l.b16 %v1734
      %v1779 = vunpack.c.l.b16 %v1735
      %v1780 = vunpack.c.l.b16 %v1736
      %v1781 = vunpack.c.l.b16 %v1737
      %v1782 = vunpack.c.l.b16 %v1738
      %v1783 = vunpack.c.l.b16 %v1739
      %v1784 = vunpack.c.l.b16 %v1740
      %v1785 = vunpack.c.l.b16 %v1741
      %v1786 = vunpack.c.l.b16 %v1742
      %v1787 = vpack.c.b16 %v1772, %v1771
      %v1788 = vpack.c.b16 %v1774, %v1773
      %v1789 = vpack.c.b16 %v1776, %v1775
      %v1790 = vpack.c.b16 %v1778, %v1777
      %v1791 = vpack.c.b16 %v1780, %v1779
      %v1792 = vpack.c.b16 %v1782, %v1781
      %v1793 = vpack.c.b16 %v1784, %v1783
      %v1794 = vpack.c.b16 %v1786, %v1785
      %1803 = vmatprep.subr.bf16.mxu0 0
      %1804 = vmatpush1.bf16.msra.mxu0 %v1794
      %1805 = vmatprep.subr.bf16.mxu0 0
      %1806 = vmatpush1.bf16.msra.mxu0 %v1793
      %1807 = vmatprep.subr.bf16.mxu0 0
      %1808 = vmatpush1.bf16.msra.mxu0 %v1792
      %1809 = vmatprep.subr.bf16.mxu0 0
      %1810 = vmatpush1.bf16.msra.mxu0 %v1791
      %1811 = vmatprep.subr.bf16.mxu0 0
      %1812 = vmatpush1.bf16.msra.mxu0 %v1790
      %1813 = vmatprep.subr.bf16.mxu0 0
      %1814 = vmatpush1.bf16.msra.mxu0 %v1789
      %1815 = vmatprep.subr.bf16.mxu0 0
      %1816 = vmatpush1.bf16.msra.mxu0 %v1788
      %1817 = vmatprep.subr.bf16.mxu0 0
      %1818 = vmatpush1.bf16.msra.mxu0 %v1787
      %1819 = vmatprep.subr.bf16.mxu0 0
      %1820 = vmatpush2.bf16.msra.mxu0 0
      %1821 = vmatprep.subr.bf16.mxu0 0
      %1822 = vmatpush2.bf16.msra.mxu0 0
      %1823 = vmatprep.subr.bf16.mxu0 0
      %1824 = vmatpush2.bf16.msra.mxu0 0
      %1825 = vmatprep.subr.bf16.mxu0 0
      %1826 = vmatpush2.bf16.msra.mxu0 0
      %1827 = vmatprep.subr.bf16.mxu0 0
      %1828 = vmatpush2.bf16.msra.mxu0 0
      %1829 = vmatprep.subr.bf16.mxu0 0
      %1830 = vmatpush2.bf16.msra.mxu0 0
      %1831 = vmatprep.subr.bf16.mxu0 0
      %1832 = vmatpush2.bf16.msra.mxu0 0
      %1833 = vmatprep.subr.bf16.mxu0 0
      %1834 = vmatpush2.bf16.msra.mxu0 0
      %1835 = vmatprep.mubr.bf16.mxu0 0
      %1836 = vmatmul.mubr.bf16.gmra.mxu0 %v1753
      %v1837 = vpop.f32.mrf.mxu0
      %v1838 = vadd.f32 0.0, %v1837
      %v1839 = vpop.f32.mrf.mxu0
      %v1840 = vpop.f32.mrf.mxu0
      %v1841 = vadd.f32 0.0, %v1840
      %v1842 = vpop.f32.mrf.mxu0
      %1843 = vdwg.mxu0
      %v1846 = vunpack.c.l.b16 %v1705
      %v1847 = vunpack.c.l.b16 %v1707
      %v1848 = vpack.c.b16 %v1747, %v1846
      %v1849 = vpack.c.b16 %v1847, %v1847
      %v1850 = vrot.slane %v1848, 2
      %v1851 = vrot.slane %v1849, 2
      %v1852 = vsel %vm1477, %v1850, %v1851
      %v1870 = vunpack.c.l.b16 %v1708
      %v1871 = vunpack.c.l.b16 %v1709
      %v1872 = vunpack.c.l.b16 %v1710
      %v1873 = vunpack.c.l.b16 %v1711
      %v1874 = vunpack.c.l.b16 %v1712
      %v1875 = vunpack.c.l.b16 %v1713
      %v1876 = vunpack.c.l.b16 %v1714
      %v1877 = vunpack.c.l.b16 %v1715
      %v1878 = vunpack.c.l.b16 %v1716
      %v1879 = vunpack.c.l.b16 %v1717
      %v1880 = vunpack.c.l.b16 %v1718
      %v1881 = vunpack.c.l.b16 %v1719
      %v1882 = vunpack.c.l.b16 %v1720
      %v1883 = vunpack.c.l.b16 %v1721
      %v1884 = vunpack.c.l.b16 %v1722
      %v1885 = vunpack.c.l.b16 %v1723
      %v1886 = vpack.c.b16 %v1871, %v1870
      %v1887 = vpack.c.b16 %v1873, %v1872
      %v1888 = vpack.c.b16 %v1875, %v1874
      %v1889 = vpack.c.b16 %v1877, %v1876
      %v1890 = vpack.c.b16 %v1879, %v1878
      %v1891 = vpack.c.b16 %v1881, %v1880
      %v1892 = vpack.c.b16 %v1883, %v1882
      %v1893 = vpack.c.b16 %v1885, %v1884
      %1902 = vmatprep.subr.bf16.mxu0 0
      %1903 = vmatpush1.bf16.msra.mxu0 %v1893
      %1904 = vmatprep.subr.bf16.mxu0 0
      %1905 = vmatpush1.bf16.msra.mxu0 %v1892
      %1906 = vmatprep.subr.bf16.mxu0 0
      %1907 = vmatpush1.bf16.msra.mxu0 %v1891
      %1908 = vmatprep.subr.bf16.mxu0 0
      %1909 = vmatpush1.bf16.msra.mxu0 %v1890
      %1910 = vmatprep.subr.bf16.mxu0 0
      %1911 = vmatpush1.bf16.msra.mxu0 %v1889
      %1912 = vmatprep.subr.bf16.mxu0 0
      %1913 = vmatpush1.bf16.msra.mxu0 %v1888
      %1914 = vmatprep.subr.bf16.mxu0 0
      %1915 = vmatpush1.bf16.msra.mxu0 %v1887
      %1916 = vmatprep.subr.bf16.mxu0 0
      %1917 = vmatpush1.bf16.msra.mxu0 %v1886
      %1918 = vmatprep.subr.bf16.mxu0 0
      %1919 = vmatpush2.bf16.msra.mxu0 0
      %1920 = vmatprep.subr.bf16.mxu0 0
      %1921 = vmatpush2.bf16.msra.mxu0 0
      %1922 = vmatprep.subr.bf16.mxu0 0
      %1923 = vmatpush2.bf16.msra.mxu0 0
      %1924 = vmatprep.subr.bf16.mxu0 0
      %1925 = vmatpush2.bf16.msra.mxu0 0
      %1926 = vmatprep.subr.bf16.mxu0 0
      %1927 = vmatpush2.bf16.msra.mxu0 0
      %1928 = vmatprep.subr.bf16.mxu0 0
      %1929 = vmatpush2.bf16.msra.mxu0 0
      %1930 = vmatprep.subr.bf16.mxu0 0
      %1931 = vmatpush2.bf16.msra.mxu0 0
      %1932 = vmatprep.subr.bf16.mxu0 0
      %1933 = vmatpush2.bf16.msra.mxu0 0
      %1934 = vmatprep.mubr.bf16.mxu0 0
      %1935 = vmatmul.mubr.bf16.gmra.mxu0 %v1852
      %v1936 = vpop.f32.mrf.mxu0
      %v1937 = vadd.f32 %v1838, %v1936
      %v1938 = vpop.f32.mrf.mxu0
      %v1939 = vpop.f32.mrf.mxu0
      %v1940 = vadd.f32 %v1841, %v1939
      %v1941 = vpop.f32.mrf.mxu0
      %1942 = vdwg.mxu0
      %v1943 = vld [vmem:[#allocation3 + $0x8] sm:$0xf]
      %s1944 = scalar_lea.vmem %s9, 128
      %v1945 = vld [vmem:[%s1944] sm:$0xf]
      %v1946 = vld [vmem:[%s1944 + $0x4] sm:$0xf]
      %v1947 = vld [vmem:[%s1944 + $0x8] sm:$0xf]
      %v1948 = vld [vmem:[%s1944 + $0xc] sm:$0xf]
      %v1949 = vld [vmem:[%s1944 + $0x10] sm:$0xf]
      %v1950 = vld [vmem:[%s1944 + $0x14] sm:$0xf]
      %v1951 = vld [vmem:[%s1944 + $0x18] sm:$0xf]
      %v1952 = vld [vmem:[%s1944 + $0x1c] sm:$0xf]
      %v1953 = vld [vmem:[%s1944 + $0x20] sm:$0xf]
      %v1954 = vld [vmem:[%s1944 + $0x24] sm:$0xf]
      %v1955 = vld [vmem:[%s1944 + $0x28] sm:$0xf]
      %v1956 = vld [vmem:[%s1944 + $0x2c] sm:$0xf]
      %v1957 = vld [vmem:[%s1944 + $0x30] sm:$0xf]
      %v1958 = vld [vmem:[%s1944 + $0x34] sm:$0xf]
      %v1959 = vld [vmem:[%s1944 + $0x38] sm:$0xf]
      %v1960 = vld [vmem:[%s1944 + $0x3c] sm:$0xf]
      %v1962 = vunpack.c.l.b16 %v1943
      %v1963 = vpack.c.b16 %v1962, %v1747
      %v1981 = vunpack.c.l.b16 %v1945
      %v1982 = vunpack.c.l.b16 %v1946
      %v1983 = vunpack.c.l.b16 %v1947
      %v1984 = vunpack.c.l.b16 %v1948
      %v1985 = vunpack.c.l.b16 %v1949
      %v1986 = vunpack.c.l.b16 %v1950
      %v1987 = vunpack.c.l.b16 %v1951
      %v1988 = vunpack.c.l.b16 %v1952
      %v1989 = vunpack.c.l.b16 %v1953
      %v1990 = vunpack.c.l.b16 %v1954
      %v1991 = vunpack.c.l.b16 %v1955
      %v1992 = vunpack.c.l.b16 %v1956
      %v1993 = vunpack.c.l.b16 %v1957
      %v1994 = vunpack.c.l.b16 %v1958
      %v1995 = vunpack.c.l.b16 %v1959
      %v1996 = vunpack.c.l.b16 %v1960
      %v1997 = vpack.c.b16 %v1982, %v1981
      %v1998 = vpack.c.b16 %v1984, %v1983
      %v1999 = vpack.c.b16 %v1986, %v1985
      %v2000 = vpack.c.b16 %v1988, %v1987
      %v2001 = vpack.c.b16 %v1990, %v1989
      %v2002 = vpack.c.b16 %v1992, %v1991
      %v2003 = vpack.c.b16 %v1994, %v1993
      %v2004 = vpack.c.b16 %v1996, %v1995
      %2013 = vmatprep.subr.bf16.mxu0 0
      %2014 = vmatpush1.bf16.msra.mxu0 %v2004
      %2015 = vmatprep.subr.bf16.mxu0 0
      %2016 = vmatpush1.bf16.msra.mxu0 %v2003
      %2017 = vmatprep.subr.bf16.mxu0 0
      %2018 = vmatpush1.bf16.msra.mxu0 %v2002
      %2019 = vmatprep.subr.bf16.mxu0 0
      %2020 = vmatpush1.bf16.msra.mxu0 %v2001
      %2021 = vmatprep.subr.bf16.mxu0 0
      %2022 = vmatpush1.bf16.msra.mxu0 %v2000
      %2023 = vmatprep.subr.bf16.mxu0 0
      %2024 = vmatpush1.bf16.msra.mxu0 %v1999
      %2025 = vmatprep.subr.bf16.mxu0 0
      %2026 = vmatpush1.bf16.msra.mxu0 %v1998
      %2027 = vmatprep.subr.bf16.mxu0 0
      %2028 = vmatpush1.bf16.msra.mxu0 %v1997
      %2029 = vmatprep.subr.bf16.mxu0 0
      %2030 = vmatpush2.bf16.msra.mxu0 0
      %2031 = vmatprep.subr.bf16.mxu0 0
      %2032 = vmatpush2.bf16.msra.mxu0 0
      %2033 = vmatprep.subr.bf16.mxu0 0
      %2034 = vmatpush2.bf16.msra.mxu0 0
      %2035 = vmatprep.subr.bf16.mxu0 0
      %2036 = vmatpush2.bf16.msra.mxu0 0
      %2037 = vmatprep.subr.bf16.mxu0 0
      %2038 = vmatpush2.bf16.msra.mxu0 0
      %2039 = vmatprep.subr.bf16.mxu0 0
      %2040 = vmatpush2.bf16.msra.mxu0 0
      %2041 = vmatprep.subr.bf16.mxu0 0
      %2042 = vmatpush2.bf16.msra.mxu0 0
      %2043 = vmatprep.subr.bf16.mxu0 0
      %2044 = vmatpush2.bf16.msra.mxu0 0
      %2045 = vmatprep.mubr.bf16.mxu0 0
      %2046 = vmatmul.mubr.bf16.gmra.mxu0 %v1963
      %v2047 = vpop.f32.mrf.mxu0
      %v2048 = vadd.f32 0.0, %v2047
      %v2049 = vpop.f32.mrf.mxu0
      %v2050 = vpop.f32.mrf.mxu0
      %v2051 = vadd.f32 0.0, %v2050
      %v2052 = vpop.f32.mrf.mxu0
      %2053 = vdwg.mxu0
      %v2054 = vadd.f32 %v1937, %v2048
      %v2055 = vadd.f32 %v1940, %v2051
      %v2056 = vld [vmem:[%s10] sm:$0x1]
      %v2057 = vunpack.c.l.bf16 %v2056
      %v2058 = vlaneseq
      %v2059 = vshrl.u32 %v2058, 7
      %v2060 = vsub.s32 0, %v2059
      %v2061 = vrot.slane %v2057, %v2060
      %v2062 = vadd.f32 %v2054, %v2061
      %v2063 = vadd.f32 %v2055, %v2061
      %v2064 = vmax.f32 %v2062, 0.0
      %v2065 = vmax.f32 %v2063, 0.0
      %v2066 = vld [vmem:[#allocation2 + $0x4] sm:$0xf]
      %v2067 = vld [vmem:[#allocation2 + $0x8] sm:$0xf]
      %v2068 = vld [vmem:[%s11] sm:$0xf]
      %v2069 = vld [vmem:[%s11 + $0x4] sm:$0xf]
      %v2070 = vld [vmem:[%s11 + $0x8] sm:$0xf]
      %v2071 = vld [vmem:[%s11 + $0xc] sm:$0xf]
      %v2072 = vld [vmem:[%s11 + $0x10] sm:$0xf]
      %v2073 = vld [vmem:[%s11 + $0x14] sm:$0xf]
      %v2074 = vld [vmem:[%s11 + $0x18] sm:$0xf]
      %v2075 = vld [vmem:[%s11 + $0x1c] sm:$0xf]
      %v2076 = vld [vmem:[%s11 + $0x20] sm:$0xf]
      %v2077 = vld [vmem:[%s11 + $0x24] sm:$0xf]
      %v2078 = vld [vmem:[%s11 + $0x28] sm:$0xf]
      %v2079 = vld [vmem:[%s11 + $0x2c] sm:$0xf]
      %v2080 = vld [vmem:[%s11 + $0x30] sm:$0xf]
      %v2081 = vld [vmem:[%s11 + $0x34] sm:$0xf]
      %v2082 = vld [vmem:[%s11 + $0x38] sm:$0xf]
      %v2083 = vld [vmem:[%s11 + $0x3c] sm:$0xf]
      %v2084 = vld [vmem:[%s12] sm:$0x1]
      %v2085 = vunpack.c.l.bf16 %v2084
      %v2086 = vlaneseq
      %v2087 = vshrl.u32 %v2086, 7
      %v2088 = vsub.s32 0, %v2087
      %v2089 = vrot.slane %v2085, %v2088
      %v2092 = vunpack.c.l.b16 %v2066
      %v2093 = vunpack.c.l.b16 %v2067
      %v2094 = vpack.c.b16 %v2093, %v2092
      %v2112 = vunpack.c.l.b16 %v2068
      %v2113 = vunpack.c.l.b16 %v2069
      %v2114 = vunpack.c.l.b16 %v2070
      %v2115 = vunpack.c.l.b16 %v2071
      %v2116 = vunpack.c.l.b16 %v2072
      %v2117 = vunpack.c.l.b16 %v2073
      %v2118 = vunpack.c.l.b16 %v2074
      %v2119 = vunpack.c.l.b16 %v2075
      %v2120 = vunpack.c.l.b16 %v2076
      %v2121 = vunpack.c.l.b16 %v2077
      %v2122 = vunpack.c.l.b16 %v2078
      %v2123 = vunpack.c.l.b16 %v2079
      %v2124 = vunpack.c.l.b16 %v2080
      %v2125 = vunpack.c.l.b16 %v2081
      %v2126 = vunpack.c.l.b16 %v2082
      %v2127 = vunpack.c.l.b16 %v2083
      %v2128 = vpack.c.b16 %v2113, %v2112
      %v2129 = vpack.c.b16 %v2115, %v2114
      %v2130 = vpack.c.b16 %v2117, %v2116
      %v2131 = vpack.c.b16 %v2119, %v2118
      %v2132 = vpack.c.b16 %v2121, %v2120
      %v2133 = vpack.c.b16 %v2123, %v2122
      %v2134 = vpack.c.b16 %v2125, %v2124
      %v2135 = vpack.c.b16 %v2127, %v2126
      %2144 = vmatprep.subr.bf16.mxu0 0
      %2145 = vmatpush1.bf16.msra.mxu0 %v2135
      %2146 = vmatprep.subr.bf16.mxu0 0
      %2147 = vmatpush1.bf16.msra.mxu0 %v2134
      %2148 = vmatprep.subr.bf16.mxu0 0
      %2149 = vmatpush1.bf16.msra.mxu0 %v2133
      %2150 = vmatprep.subr.bf16.mxu0 0
      %2151 = vmatpush1.bf16.msra.mxu0 %v2132
      %2152 = vmatprep.subr.bf16.mxu0 0
      %2153 = vmatpush1.bf16.msra.mxu0 %v2131
      %2154 = vmatprep.subr.bf16.mxu0 0
      %2155 = vmatpush1.bf16.msra.mxu0 %v2130
      %2156 = vmatprep.subr.bf16.mxu0 0
      %2157 = vmatpush1.bf16.msra.mxu0 %v2129
      %2158 = vmatprep.subr.bf16.mxu0 0
      %2159 = vmatpush1.bf16.msra.mxu0 %v2128
      %2160 = vmatprep.subr.bf16.mxu0 0
      %2161 = vmatpush2.bf16.msra.mxu0 0
      %2162 = vmatprep.subr.bf16.mxu0 0
      %2163 = vmatpush2.bf16.msra.mxu0 0
      %2164 = vmatprep.subr.bf16.mxu0 0
      %2165 = vmatpush2.bf16.msra.mxu0 0
      %2166 = vmatprep.subr.bf16.mxu0 0
      %2167 = vmatpush2.bf16.msra.mxu0 0
      %2168 = vmatprep.subr.bf16.mxu0 0
      %2169 = vmatpush2.bf16.msra.mxu0 0
      %2170 = vmatprep.subr.bf16.mxu0 0
      %2171 = vmatpush2.bf16.msra.mxu0 0
      %2172 = vmatprep.subr.bf16.mxu0 0
      %2173 = vmatpush2.bf16.msra.mxu0 0
      %2174 = vmatprep.subr.bf16.mxu0 0
      %2175 = vmatpush2.bf16.msra.mxu0 0
      %2176 = vmatprep.mubr.bf16.mxu0 0
      %2177 = vmatmul.mubr.bf16.gmra.mxu0 %v2094
      %v2178 = vpop.f32.mrf.mxu0
      %v2179 = vadd.f32 %v2089, %v2178
      %v2180 = vpop.f32.mrf.mxu0
      %v2181 = vpop.f32.mrf.mxu0
      %v2182 = vadd.f32 %v2089, %v2181
      %v2183 = vpop.f32.mrf.mxu0
      %2184 = vdwg.mxu0
      %v2185 = vadd.f32 %v2064, %v2179
      %v2186 = vadd.f32 %v2065, %v2182
      %v2187 = vmax.f32 %v2185, 0.0
      %v2188 = vmax.f32 %v2186, 0.0
      %v2189 = vpack.c.bf16 %v2188, %v2187
      %v2191 = vunpack.c.l.b16 %v2189
      %v2192 = vunpack.c.h.b16 %v2189
      %v2193 = vpack.c.b16 %v2191, %v2191
      %v2194 = vpack.c.b16 %v2192, %v2192
      %2197 = vst [vmem:[#allocation2 + $0x4] sm:$0xf] %v2193
      %2198 = vst [vmem:[#allocation2 + $0x8] sm:$0xf] %v2194
      %v2199 = vld [vmem:[#allocation2 + $0x4] sm:$0xf]
      %v2200 = vld [vmem:[#allocation2 + $0x8] sm:$0xf]
      %2201 = vst [vmem:[%s440] sm:$0xf] %v2199
      %2202 = vst [vmem:[%s440 + $0x4] sm:$0xf] %v2200
      %p2203 = scmp.lt.s32.totalorder %s24, 1
      %s2204 = scalar_select %p2203, %s24, 1
      %s2205 = smul.addr %s2204, 2
      %s2206 = smul.addr %s2205, 4
      %s2207 = scalar_lea.vmem %s13, %s2206
      // Predicated region
      $region73: #{tcn_forward.1} parent=71 // pred_check
        %p2208 = pneg %p320
      $region74: #{tcn_forward.1} parent=71 // pred_check_branch
        %2210 = sbr.rel (%p2208) target = $region76
      $region75: #{tcn_forward.1} parent=71 // pred_region
        _
      $region76: #{tcn_forward.1} parent=71 // pred_fallthru
        _
    $region72: #{tcn_forward.1} parent=5 // pred_fallthru
      _
    %p2211 = scmp.le.s32.totalorder 2, %s19
    // Predicated region
    $region77: #{tcn_forward.1} parent=5 // pred_check
      %p2212 = pneg %p2211
    $region78: #{tcn_forward.1} parent=5 // pred_check_branch
      %2214 = sbr.rel (%p2212) target = $region80
    $region79: #{tcn_forward.1} parent=5 // pred_region
      %s2215 = ssub.s32 %s19, 2
      // Predicated region
      $region81: #{tcn_forward.1} parent=79 // pred_check
        %p2216 = pneg %p326
      $region82: #{tcn_forward.1} parent=79 // pred_check_branch
        %2218 = sbr.rel (%p2216) target = $region84
      $region83: #{tcn_forward.1} parent=79 // pred_region
        %p2219 = scmp.lt.s32.totalorder %s25, 1
        %s2220 = scalar_select %p2219, %s25, 1
        %s2221 = smul.addr %s2220, 2
        %s2222 = smul.addr %s2221, 4
        %s2223 = scalar_lea.vmem %s13, %s2222
      $region84: #{tcn_forward.1} parent=79 // pred_fallthru
        _
    $region80: #{tcn_forward.1} parent=5 // pred_fallthru
      _
  $region6: #{tcn_forward.1} parent=0 // loop_footer
    %s23 = sadd.s32 1, %s19
  $region7: #{tcn_forward.1} parent=0 // loop_footer_branch
    %18 = sbr.rel target = $region3
  $region8: #{tcn_forward.1} parent=0 // loop_exit
    _

</llo_original>
